<compile_context>
chip_gen: v7x
topology: tpu7x:2x2x1
jax: 0.10.0
libtpu: 0.0.40
codegen_flags: <defaults>
</compile_context>

<pallas_src>
import functools

import jax
import jax.numpy as jnp
import numpy as np
from jax import lax
from jax.experimental import pallas as pl
from jax.experimental.pallas import tpu as pltpu


# ------------------------------ Pallas kernel ------------------------------ #
def _repconv_kernel(x_ref, w_ref, b_ref, o_ref, *, ksize, tile_h, wp, n_tiles,
                    mxu_dtype):
    # x_ref: (1, Cin, Hp*Wp)   zero-padded image, spatial flattened on the lane axis
    # w_ref: (K*K, Cout, Cin)  folded 3x3 weight, one (Cout, Cin) slab per tap
    # b_ref: (Cout, 1)         folded bias
    # o_ref: (1, Cout, TH*Wp)  one row tile of the padded-width output
    lanes_out = tile_h * wp
    # Window of padded rows needed by this tile, plus (K-1) lanes of slack so the
    # taps of the 2 throw-away columns per row stay in bounds (covered by the
    # extra zero pad row added in the wrapper).
    lanes_win = (tile_h + ksize - 1) * wp + (ksize - 1)

    if n_tiles == 1:
        xt = x_ref[0]                                       # (Cin, Hp*Wp)
    else:
        # lanes_out % 128 == 0 by construction -> the dynamic window start is
        # 128-lane aligned (no relayout on the load).
        start = pl.multiple_of(pl.program_id(1) * lanes_out, 128)
        xt = x_ref[0, :, pl.ds(start, lanes_win)]           # (Cin, lanes_win)
    if xt.dtype != mxu_dtype:
        # Single per-tile cast (weights are pre-cast in the wrapper, not per step).
        xt = xt.astype(mxu_dtype)

    # Nine per-tap MXU dots accumulated in f32.  Each tap operand is a static
    # 1-D lane-shifted window of xt: no concat, no (TH,Wout)->TH*Wout relayout,
    # no 9x im2col buffer.  Columns j >= Wout of each row are garbage (they read
    # the neighbouring pad/extra-pad lanes) and are stripped in the wrapper.
    acc = None
    for kh in range(ksize):
        for kw in range(ksize):
            shift = kh * wp + kw
            rhs = xt[:, shift:shift + lanes_out]            # (Cin, TH*Wp)
            tap = jnp.dot(w_ref[kh * ksize + kw], rhs,
                          preferred_element_type=jnp.float32)
            acc = tap if acc is None else acc + tap

    y = acc + b_ref[...]                                    # (Cout, 1) broadcast
    o_ref[0] = (y * jax.nn.sigmoid(y)).astype(o_ref.dtype)  # SiLU = x * sigmoid(x)


# -------------------------------- wrapper ----------------------------------- #
def _vmem_limit_bytes():
    """Per-generation scoped-VMEM request: 3/4 of physical, capped at 96 MiB
    (-> ~96 MiB on v5e/v6e, ~48 MiB on v7x); conservative 32 MiB fallback."""
    try:
        info = pltpu.get_tpu_info()
        phys = 0
        for attr in ("vmem_capacity_bytes", "vmem_bytes", "vmem_size_bytes"):
            phys = int(getattr(info, attr, 0) or 0)
            if phys:
                break
        if phys > 0:
            return int(min(phys * 3 // 4, 96 << 20))
    except Exception:
        pass
    return 32 << 20


def _pick_row_tile(h_out, wp, cin, cout, hp, x_bytes, rhs_bytes, budget):
    """Largest row tile TH (either TH == Hout, or Hout % TH == 0 with
    TH*Wp % 128 == 0 so the flattened output block stays (8,128)-legal and every
    dynamic window start is lane-aligned) whose working set fits the budget."""
    def est(th):
        win_lanes = (th + 2) * wp + 2
        return (2 * cin * hp * wp * x_bytes            # resident padded image (x2 bufs)
                + 2 * cout * th * wp * 4               # output block (x2 bufs)
                + 2 * 9 * cout * cin * rhs_bytes       # folded weights
                + cin * win_lanes * (x_bytes + 2 * rhs_bytes)   # window + shifted temps
                + 2 * cout * th * wp * 4)              # f32 accumulator + SiLU temps

    cands = [th for th in range(1, h_out + 1)
             if th == h_out or (h_out % th == 0 and (th * wp) % 128 == 0)]
    for th in sorted(cands, reverse=True):             # largest first
        if est(th) <= budget:
            return th
    sane = [th for th in cands if th >= 8] or cands    # avoid degenerate tiles
    return min(sane)   # nothing fits the budget: smallest tile; see halo TODO


def repconv_forward(x_nchw, params, *, stride=1, mxu_dtype=None):
    """x_nchw: (N, Cin, H, W) float32 -> (N, Cout, Hout, Wout) float32."""
    assert stride == 1, "only the default RepConv stride=1 path is implemented"
    x = x_nchw.astype(jnp.float32)
    n, cin, h, w = x.shape
    ksize, pad = 3, 1
    h_out, w_out = h, w                      # k=3, s=1, p=1
    hp, wp = h + pad + 2, w + 2 * pad        # one extra bottom pad row = tap slack
    cout = params['w9'].shape[1]

    # bf16 MXU operands when the contraction is big enough to benefit (v6e/v7x);
    # tiny channel counts (and the unit test) stay exact in f32.
    if mxu_dtype is None:
        mxu_dtype = jnp.bfloat16 if 9 * cin >= 128 else jnp.float32
    w9 = params['w9'].astype(mxu_dtype)      # weight pre-cast once, wrapper-side
    bias = params['b']

    # Single spatial zero-pad; the reshape to a flat lane axis is metadata-only.
    # TODO(synk): fold this pad into the kernel to drop one input HBM pass.
    xp = jnp.pad(x, ((0, 0), (0, 0), (pad, pad + 1), (pad, pad)))
    xflat = xp.reshape(n, cin, hp * wp)

    vmem_limit = _vmem_limit_bytes()
    tile_h = _pick_row_tile(h_out, wp, cin, cout, hp, 4,
                            jnp.dtype(mxu_dtype).itemsize,
                            int(vmem_limit * 0.8))
    n_tiles = h_out // tile_h

    kernel = functools.partial(_repconv_kernel, ksize=ksize, tile_h=tile_h, wp=wp,
                               n_tiles=n_tiles, mxu_dtype=mxu_dtype)

    cost = pl.CostEstimate(
        flops=2 * n * h_out * w_out * cout * ksize * ksize * cin,
        transcendentals=n * cout * h_out * w_out,
        bytes_accessed=int(xflat.size) * 4 + int(w9.size) * jnp.dtype(mxu_dtype).itemsize
                       + n * cout * h_out * wp * 4)

    # Batch axis parallel (megacore splits batch); row-tile axis arbitrary when
    # N >= 2 so the two v7x cores never duplicate the same image in VMEM.
    t_sem = "arbitrary" if n >= 2 else "parallel"

    out_flat = pl.pallas_call(
        kernel,
        out_shape=jax.ShapeDtypeStruct((n, cout, h_out * wp), jnp.float32),
        grid=(n, n_tiles),
        in_specs=[
            # Full padded image per batch element; block index constant along the
            # row-tile axis -> DMA'd to VMEM once per image and overlapped by the
            # pipeline across batch elements.  (Halo-tiled manual DMA TODO above.)
            pl.BlockSpec((1, cin, hp * wp), lambda b, t: (b, 0, 0)),
            pl.BlockSpec((ksize * ksize, cout, cin), lambda b, t: (0, 0, 0)),
            pl.BlockSpec((cout, 1), lambda b, t: (0, 0)),
        ],
        out_specs=pl.BlockSpec((1, cout, tile_h * wp), lambda b, t: (b, 0, t)),
        compiler_params=pltpu.CompilerParams(
            dimension_semantics=("parallel", t_sem),
            vmem_limit_bytes=vmem_limit,
        ),
        cost_estimate=cost,
    )(xflat, w9, bias)

    # (N, Cout, Hout*Wp) -> (N, Cout, Hout, Wp) is metadata-only; stripping the
    # two dead pad columns per row is a cheap wrapper slice (keeps the kernel's
    # stores lane-dense instead of an in-kernel relayout).
    out = out_flat.reshape(n, cout, h_out, wp)[..., :w_out]
    return out


# ------------------ parameter construction (deterministic) ------------------ #
def make_params(key, c1, c2, stride=1, eps=1e-5):
    """Random RepConv parameters (PyTorch layouts) + folded kernel parameters."""
    ks = jax.random.split(key, 14)
    w3 = 0.1 * jax.random.normal(ks[0], (c2, c1, 3, 3), jnp.float32)   # rbr_dense conv
    w1 = 0.1 * jax.random.normal(ks[1], (c2, c1, 1, 1), jnp.float32)   # rbr_1x1 conv

    def bn(kg, kb, km, kv, c):
        return dict(gamma=1.0 + 0.1 * jax.random.normal(kg, (c,), jnp.float32),
                    beta=0.1 * jax.random.normal(kb, (c,), jnp.float32),
                    mean=0.1 * jax.random.normal(km, (c,), jnp.float32),
                    var=1.0 + 0.1 * jax.random.uniform(kv, (c,), jnp.float32))

    bn_dense = bn(ks[2], ks[3], ks[4], ks[5], c2)
    bn_1x1 = bn(ks[6], ks[7], ks[8], ks[9], c2)
    has_id = (c1 == c2 and stride == 1)
    bn_id = bn(ks[10], ks[11], ks[12], ks[13], c1) if has_id else None

    # ---- fold the three branches into one 3x3 conv + bias (eval-mode BN) ----
    def fuse(wk, p):
        s = p['gamma'] / jnp.sqrt(p['var'] + eps)
        return wk * s[:, None, None, None], p['beta'] - p['mean'] * s

    k3, b3 = fuse(w3, bn_dense)
    k1, b1 = fuse(w1, bn_1x1)
    k1 = jnp.pad(k1, ((0, 0), (0, 0), (1, 1), (1, 1)))       # 1x1 -> centered 3x3
    w_eq, b_eq = k3 + k1, b3 + b1
    if has_id:
        sid = bn_id['gamma'] / jnp.sqrt(bn_id['var'] + eps)
        kid = jnp.zeros((c2, c1, 3, 3), jnp.float32)
        kid = kid.at[jnp.arange(c1), jnp.arange(c1), 1, 1].set(sid)
        w_eq = w_eq + kid
        b_eq = b_eq + (bn_id['beta'] - bn_id['mean'] * sid)

    # Kernel layout: (K*K, Cout, Cin) so w9[kh*3+kw] is the (Cout, Cin) tap slab.
    w9 = jnp.transpose(w_eq, (2, 3, 0, 1)).reshape(9, c2, c1)
    kernel_params = dict(w9=w9, b=b_eq.reshape(c2, 1))
    torch_params = dict(w3=w3, w1=w1, bn_dense=bn_dense, bn_1x1=bn_1x1,
                        bn_id=bn_id, eps=eps)
    return kernel_params, torch_params


# ---------------------------- pure-JAX reference ----------------------------- #
def ref_forward(x, tp, *, stride=1):
    """Branch-wise RepConv forward (eval-mode BN), exactly mirroring torch eval."""
    eps = tp['eps']

    def bn(y, p):
        s = p['gamma'] / jnp.sqrt(p['var'] + eps)
        return (y * s[None, :, None, None]
                + (p['beta'] - p['mean'] * s)[None, :, None, None])

    conv = functools.partial(lax.conv_general_dilated,
                             dimension_numbers=('NCHW', 'OIHW', 'NCHW'),
                             precision=lax.Precision.HIGHEST)
    dense = bn(conv(x, tp['w3'], (stride, stride), ((1, 1), (1, 1))), tp['bn_dense'])
    one = bn(conv(x, tp['w1'], (stride, stride), ((0, 0), (0, 0))), tp['bn_1x1'])
    y = dense + one
    if tp['bn_id'] is not None:
        y = y + bn(x, tp['bn_id'])
    return y * jax.nn.sigmoid(y)


# ------------------------------------ main ----------------------------------- #
if __name__ == "__main__":
    key = jax.random.PRNGKey(0)
    configs = [
        dict(n=2, c1=4, c2=8, h=16, w=16),   # no identity branch (c1 != c2)
        dict(n=2, c1=8, c2=8, h=16, w=16),   # identity branch active (c1 == c2)
    ]
    for cfg in configs:
        kx, kp, key = jax.random.split(key, 3)
        x = jax.random.normal(kx, (cfg['n'], cfg['c1'], cfg['h'], cfg['w']),
                              jnp.float32)
        kernel_params, torch_params = make_params(kp, cfg['c1'], cfg['c2'])

        out = jax.block_until_ready(repconv_forward(x, kernel_params))
        ref = jax.block_until_ready(ref_forward(x, torch_params))
        np.testing.assert_allclose(np.asarray(out), np.asarray(ref),
                                   rtol=1e-3, atol=1e-3)

    print("KERNEL_OK")
</pallas_src>

<mosaic_0001>
module attributes {stable_mosaic.version = 11 : i64} {
  func.func @_repconv_kernel(%arg0: i32, %arg1: i32, %arg2: memref<1x4x342xf32, #tpu.memory_space<vmem>>, %arg3: memref<9x8x4xf32, #tpu.memory_space<vmem>>, %arg4: memref<8x1xf32, #tpu.memory_space<vmem>>, %arg5: memref<1x8x288xf32, #tpu.memory_space<vmem>>) attributes {dimension_semantics = [#tpu.dimension_semantics<parallel>, #tpu.dimension_semantics<arbitrary>], iteration_bounds = array<i64: 2, 1>, scalar_prefetch = 0 : i64, scratch_operands = 0 : i64, tpu.core_type = #tpu.core_type<tc>, window_params = [{transform_indices = @transform_0, window_bounds = array<i64: 1, 4, 342>}, {pipeline_mode = #tpu.pipeline_mode<synchronous>, transform_indices = @transform_1, window_bounds = array<i64: 9, 8, 4>}, {pipeline_mode = #tpu.pipeline_mode<synchronous>, transform_indices = @transform_2, window_bounds = array<i64: 8, 1>}, {transform_indices = @transform_3, window_bounds = array<i64: 1, 8, 288>}]} {
    %c0 = arith.constant 0 : index
    %c0_0 = arith.constant 0 : index
    %c0_1 = arith.constant 0 : index
    %0 = vector.load %arg2[%c0, %c0_0, %c0_1] : memref<1x4x342xf32, #tpu.memory_space<vmem>>, vector<1x4x342xf32>
    %1 = vector.shape_cast %0 : vector<1x4x342xf32> to vector<4x342xf32>
    %2 = vector.extract_strided_slice %1 {offsets = [0, 0], sizes = [4, 288], strides = [1, 1]} : vector<4x342xf32> to vector<4x288xf32>
    %c0_2 = arith.constant 0 : index
    %c0_3 = arith.constant 0 : index
    %c0_4 = arith.constant 0 : index
    %3 = vector.load %arg3[%c0_2, %c0_3, %c0_4] : memref<9x8x4xf32, #tpu.memory_space<vmem>>, vector<1x8x4xf32>
    %4 = vector.shape_cast %3 : vector<1x8x4xf32> to vector<8x4xf32>
    %cst = arith.constant dense<0.000000e+00> : vector<8x288xf32>
    %5 = tpu.matmul %4, %2, %cst {dimension_numbers = #tpu.dot_dimension_numbers<[1], [0], [0], [1], [0, 0, 1, 1], [], []>} : vector<8x4xf32>, vector<4x288xf32>, vector<8x288xf32> -> vector<8x288xf32>
    %6 = vector.extract_strided_slice %1 {offsets = [0, 1], sizes = [4, 288], strides = [1, 1]} : vector<4x342xf32> to vector<4x288xf32>
    %c1 = arith.constant 1 : index
    %c0_5 = arith.constant 0 : index
    %c0_6 = arith.constant 0 : index
    %7 = vector.load %arg3[%c1, %c0_5, %c0_6] : memref<9x8x4xf32, #tpu.memory_space<vmem>>, vector<1x8x4xf32>
    %8 = vector.shape_cast %7 : vector<1x8x4xf32> to vector<8x4xf32>
    %cst_7 = arith.constant dense<0.000000e+00> : vector<8x288xf32>
    %9 = tpu.matmul %8, %6, %cst_7 {dimension_numbers = #tpu.dot_dimension_numbers<[1], [0], [0], [1], [0, 0, 1, 1], [], []>} : vector<8x4xf32>, vector<4x288xf32>, vector<8x288xf32> -> vector<8x288xf32>
    %10 = arith.addf %5, %9 : vector<8x288xf32>
    %11 = vector.extract_strided_slice %1 {offsets = [0, 2], sizes = [4, 288], strides = [1, 1]} : vector<4x342xf32> to vector<4x288xf32>
    %c2 = arith.constant 2 : index
    %c0_8 = arith.constant 0 : index
    %c0_9 = arith.constant 0 : index
    %12 = vector.load %arg3[%c2, %c0_8, %c0_9] : memref<9x8x4xf32, #tpu.memory_space<vmem>>, vector<1x8x4xf32>
    %13 = vector.shape_cast %12 : vector<1x8x4xf32> to vector<8x4xf32>
    %cst_10 = arith.constant dense<0.000000e+00> : vector<8x288xf32>
    %14 = tpu.matmul %13, %11, %cst_10 {dimension_numbers = #tpu.dot_dimension_numbers<[1], [0], [0], [1], [0, 0, 1, 1], [], []>} : vector<8x4xf32>, vector<4x288xf32>, vector<8x288xf32> -> vector<8x288xf32>
    %15 = arith.addf %10, %14 : vector<8x288xf32>
    %16 = vector.extract_strided_slice %1 {offsets = [0, 18], sizes = [4, 288], strides = [1, 1]} : vector<4x342xf32> to vector<4x288xf32>
    %c3 = arith.constant 3 : index
    %c0_11 = arith.constant 0 : index
    %c0_12 = arith.constant 0 : index
    %17 = vector.load %arg3[%c3, %c0_11, %c0_12] : memref<9x8x4xf32, #tpu.memory_space<vmem>>, vector<1x8x4xf32>
    %18 = vector.shape_cast %17 : vector<1x8x4xf32> to vector<8x4xf32>
    %cst_13 = arith.constant dense<0.000000e+00> : vector<8x288xf32>
    %19 = tpu.matmul %18, %16, %cst_13 {dimension_numbers = #tpu.dot_dimension_numbers<[1], [0], [0], [1], [0, 0, 1, 1], [], []>} : vector<8x4xf32>, vector<4x288xf32>, vector<8x288xf32> -> vector<8x288xf32>
    %20 = arith.addf %15, %19 : vector<8x288xf32>
    %21 = vector.extract_strided_slice %1 {offsets = [0, 19], sizes = [4, 288], strides = [1, 1]} : vector<4x342xf32> to vector<4x288xf32>
    %c4 = arith.constant 4 : index
    %c0_14 = arith.constant 0 : index
    %c0_15 = arith.constant 0 : index
    %22 = vector.load %arg3[%c4, %c0_14, %c0_15] : memref<9x8x4xf32, #tpu.memory_space<vmem>>, vector<1x8x4xf32>
    %23 = vector.shape_cast %22 : vector<1x8x4xf32> to vector<8x4xf32>
    %cst_16 = arith.constant dense<0.000000e+00> : vector<8x288xf32>
    %24 = tpu.matmul %23, %21, %cst_16 {dimension_numbers = #tpu.dot_dimension_numbers<[1], [0], [0], [1], [0, 0, 1, 1], [], []>} : vector<8x4xf32>, vector<4x288xf32>, vector<8x288xf32> -> vector<8x288xf32>
    %25 = arith.addf %20, %24 : vector<8x288xf32>
    %26 = vector.extract_strided_slice %1 {offsets = [0, 20], sizes = [4, 288], strides = [1, 1]} : vector<4x342xf32> to vector<4x288xf32>
    %c5 = arith.constant 5 : index
    %c0_17 = arith.constant 0 : index
    %c0_18 = arith.constant 0 : index
    %27 = vector.load %arg3[%c5, %c0_17, %c0_18] : memref<9x8x4xf32, #tpu.memory_space<vmem>>, vector<1x8x4xf32>
    %28 = vector.shape_cast %27 : vector<1x8x4xf32> to vector<8x4xf32>
    %cst_19 = arith.constant dense<0.000000e+00> : vector<8x288xf32>
    %29 = tpu.matmul %28, %26, %cst_19 {dimension_numbers = #tpu.dot_dimension_numbers<[1], [0], [0], [1], [0, 0, 1, 1], [], []>} : vector<8x4xf32>, vector<4x288xf32>, vector<8x288xf32> -> vector<8x288xf32>
    %30 = arith.addf %25, %29 : vector<8x288xf32>
    %31 = vector.extract_strided_slice %1 {offsets = [0, 36], sizes = [4, 288], strides = [1, 1]} : vector<4x342xf32> to vector<4x288xf32>
    %c6 = arith.constant 6 : index
    %c0_20 = arith.constant 0 : index
    %c0_21 = arith.constant 0 : index
    %32 = vector.load %arg3[%c6, %c0_20, %c0_21] : memref<9x8x4xf32, #tpu.memory_space<vmem>>, vector<1x8x4xf32>
    %33 = vector.shape_cast %32 : vector<1x8x4xf32> to vector<8x4xf32>
    %cst_22 = arith.constant dense<0.000000e+00> : vector<8x288xf32>
    %34 = tpu.matmul %33, %31, %cst_22 {dimension_numbers = #tpu.dot_dimension_numbers<[1], [0], [0], [1], [0, 0, 1, 1], [], []>} : vector<8x4xf32>, vector<4x288xf32>, vector<8x288xf32> -> vector<8x288xf32>
    %35 = arith.addf %30, %34 : vector<8x288xf32>
    %36 = vector.extract_strided_slice %1 {offsets = [0, 37], sizes = [4, 288], strides = [1, 1]} : vector<4x342xf32> to vector<4x288xf32>
    %c7 = arith.constant 7 : index
    %c0_23 = arith.constant 0 : index
    %c0_24 = arith.constant 0 : index
    %37 = vector.load %arg3[%c7, %c0_23, %c0_24] : memref<9x8x4xf32, #tpu.memory_space<vmem>>, vector<1x8x4xf32>
    %38 = vector.shape_cast %37 : vector<1x8x4xf32> to vector<8x4xf32>
    %cst_25 = arith.constant dense<0.000000e+00> : vector<8x288xf32>
    %39 = tpu.matmul %38, %36, %cst_25 {dimension_numbers = #tpu.dot_dimension_numbers<[1], [0], [0], [1], [0, 0, 1, 1], [], []>} : vector<8x4xf32>, vector<4x288xf32>, vector<8x288xf32> -> vector<8x288xf32>
    %40 = arith.addf %35, %39 : vector<8x288xf32>
    %41 = vector.extract_strided_slice %1 {offsets = [0, 38], sizes = [4, 288], strides = [1, 1]} : vector<4x342xf32> to vector<4x288xf32>
    %c8 = arith.constant 8 : index
    %c0_26 = arith.constant 0 : index
    %c0_27 = arith.constant 0 : index
    %42 = vector.load %arg3[%c8, %c0_26, %c0_27] : memref<9x8x4xf32, #tpu.memory_space<vmem>>, vector<1x8x4xf32>
    %43 = vector.shape_cast %42 : vector<1x8x4xf32> to vector<8x4xf32>
    %cst_28 = arith.constant dense<0.000000e+00> : vector<8x288xf32>
    %44 = tpu.matmul %43, %41, %cst_28 {dimension_numbers = #tpu.dot_dimension_numbers<[1], [0], [0], [1], [0, 0, 1, 1], [], []>} : vector<8x4xf32>, vector<4x288xf32>, vector<8x288xf32> -> vector<8x288xf32>
    %45 = arith.addf %40, %44 : vector<8x288xf32>
    %c0_29 = arith.constant 0 : index
    %c0_30 = arith.constant 0 : index
    %46 = vector.load %arg4[%c0_29, %c0_30] : memref<8x1xf32, #tpu.memory_space<vmem>>, vector<8x1xf32>
    %47 = vector.broadcast %46 : vector<8x1xf32> to vector<8x288xf32>
    %48 = arith.addf %45, %47 : vector<8x288xf32>
    %49 = arith.negf %48 : vector<8x288xf32>
    %50 = math.exp %49 : vector<8x288xf32>
    %cst_31 = arith.constant 1.000000e+00 : f32
    %51 = vector.broadcast %cst_31 : f32 to vector<8x288xf32>
    %52 = arith.addf %51, %50 : vector<8x288xf32>
    %53 = arith.divf %51, %52 : vector<8x288xf32>
    %54 = arith.mulf %48, %53 : vector<8x288xf32>
    %c0_32 = arith.constant 0 : index
    %c0_33 = arith.constant 0 : index
    %c0_34 = arith.constant 0 : index
    %55 = vector.load %arg5[%c0_32, %c0_33, %c0_34] : memref<1x8x288xf32, #tpu.memory_space<vmem>>, vector<1x8x288xf32>
    %56 = vector.shape_cast %55 : vector<1x8x288xf32> to vector<8x288xf32>
    %57 = vector.shape_cast %54 : vector<8x288xf32> to vector<1x8x288xf32>
    tpu.vector_store %arg5[%c0_32, %c0_33, %c0_34], %57 {strides = array<i32>} : memref<1x8x288xf32, #tpu.memory_space<vmem>>, vector<1x8x288xf32>,
    return
  }
  func.func @transform_0(%arg0: i32, %arg1: i32) -> (i32, i32, i32) {
    %c0_i32 = arith.constant 0 : i32
    %c0_i32_0 = arith.constant 0 : i32
    %c0_i32_1 = arith.constant 0 : i32
    return %arg0, %c0_i32, %c0_i32_0 : i32, i32, i32
  }
  func.func @transform_1(%arg0: i32, %arg1: i32) -> (i32, i32, i32) {
    %c0_i32 = arith.constant 0 : i32
    %c0_i32_0 = arith.constant 0 : i32
    %c0_i32_1 = arith.constant 0 : i32
    %c0_i32_2 = arith.constant 0 : i32
    return %c0_i32, %c0_i32_0, %c0_i32_1 : i32, i32, i32
  }
  func.func @transform_2(%arg0: i32, %arg1: i32) -> (i32, i32) {
    %c0_i32 = arith.constant 0 : i32
    %c0_i32_0 = arith.constant 0 : i32
    %c0_i32_1 = arith.constant 0 : i32
    return %c0_i32, %c0_i32_0 : i32, i32
  }
  func.func @transform_3(%arg0: i32, %arg1: i32) -> (i32, i32, i32) {
    %c0_i32 = arith.constant 0 : i32
    %c0_i32_0 = arith.constant 0 : i32
    return %arg0, %c0_i32, %arg1 : i32, i32, i32
  }
}

</mosaic_0001>

<llo_original>
// kernel: tpu_custom_call.1
$region0: #{tpu_custom_call.1}
  #allocation0 [shape = 'u32[]', space=smem, size = 0x4, offset = 0x4, fixed_abs, tag = 'smem constant byte address 0x4 - core index']
  #allocation1 [shape = 'u32[144,128]{1,0:T(1,128)}', space=vmem, size = 0x12000, scoped, tag = 'internal scratch']
  %s0 = inlined_call_operand.vmem [shape: f32[2,4,342], index: 0, kind: input, shape index: {}]
  %s1 = inlined_call_operand.vmem [shape: f32[9,8,4], index: 1, kind: input, shape index: {}]
  %s2 = inlined_call_operand.vmem [shape: f32[8,1], index: 2, kind: input, shape index: {}]
  %s3 = inlined_call_operand.hbm [shape: f32[2,8,288], index: 3, kind: output, shape index: {}]
  %s4 = sld [smem:[#allocation0]]
  $region45: #{tpu_custom_call.1} parent=0
    _
  %s6 = ssub.s32 1, %s4
  %s7 = scalar_select 0, %s6, %s4
  $region1: #{tpu_custom_call.1} parent=0
    #allocation2 [shape = 'u8[24576]{0}', space=vmem, size = 0x6000, scoped, tag = 'output window, operand 0']
    #allocation3 [shape = 's32[2]{0}', space=sflag, size = 0x8, scoped, tag = 'scoped memory for tpu_custom_call.1']
    %8 = vsyncpa [#allocation3], 0
    %s9 = scalar_lea.sflag [#allocation3], 1
    %10 = vsyncpa %s9, 0
    loop: start=0, step=1, limit=4
    $region2: #{tpu_custom_call.1} parent=1 // loop_pre_header
      _
    $region3: #{tpu_custom_call.1} parent=1 // loop_header
      %s12 = sphi 0, %s16
      %p13 = scmp.ge.s32.totalorder %s12, 4
      %s19 = sphi 0, %s31
      %s20 = sphi 0, %s27
      %s21 = sphi 0, %s19
      %s22 = sphi 0, %s20
      %s23 = sphi 0, %s21
      %s24 = sphi 0, %s22
      %s34 = sphi 0, %s36
      %s37 = sphi 0, %s34
      %s38 = sphi 0, %s37
      %s54 = sphi 0, %s38
      %s58 = sphi 0, %s58
      %s60 = sphi 0, %s58
      %s61 = sphi 0, %s60
      %s75 = sphi 0, %s61
      %s79 = sphi 0, %s79
      %s81 = sphi 0, %s79
      %s82 = sphi 0, %s81
      %s96 = sphi 0, %s82
      %s104 = sphi 0, %s106
      %s107 = sphi 0, %s104
      %s108 = sphi 0, %s107
      %s124 = sphi 0, %s108
    $region4: #{tpu_custom_call.1} parent=1 // loop_header_branch
      %15 = sbr.rel (%p13) target = $region8
    $region5: #{tpu_custom_call.1} parent=1 // loop_body
      %s17 = ssub.s32 %s12, 1
      %s18 = ssub.s32 %s12, 2
      %s25 = sadd.s32 1, %s20
      %p26 = scmp.ge.s32.totalorder %s25, 1
      %s27 = scalar_select %p26, 0, %s25
      %s28 = sadd.s32 1, %s19
      %s29 = scalar_select %p26, %s28, %s19
      %p30 = scmp.ge.s32.totalorder %s29, 2
      %s31 = scalar_select %p30, 0, %s29
      %s32 = ssub.s32 %s19, %s31
      %p33 = scmp.eq.s32.totalorder %s32, 0
      %s35 = sadd.s32 %s34, 1
      %s36 = scalar_select %p33, %s34, %s35
      %p39 = pneg %p33
      %p40 = scmp.eq.s32.totalorder %s12, 1
      %p41 = por %p39, %p40
      %p42 = scmp.ne.s32.totalorder %s34, %s37
      %p43 = scmp.eq.s32.totalorder %s12, 0
      %p44 = por %p42, %p43
      %p45 = scmp.ne.s32.totalorder %s34, %s37
      %p46 = scmp.eq.s32.totalorder %s17, 1
      %p47 = por %p45, %p46
      %p48 = scmp.ne.s32.totalorder %s37, %s38
      %p49 = scmp.eq.s32.totalorder %s17, 0
      %p50 = por %p48, %p49
      %p51 = scmp.ne.s32.totalorder %s37, %s38
      %p52 = scmp.eq.s32.totalorder %s18, 1
      %p53 = por %p51, %p52
      %p55 = scmp.ne.s32.totalorder %s38, %s54
      %p56 = scmp.eq.s32.totalorder %s18, 0
      %p57 = por %p55, %p56
      %s59 = sadd.s32 %s58, 1
      %p62 = scmp.eq.s32.totalorder %s12, 1
      %p63 = scmp.ne.s32.totalorder %s58, %s60
      %p64 = scmp.eq.s32.totalorder %s12, 0
      %p65 = por %p63, %p64
      %p66 = scmp.ne.s32.totalorder %s58, %s60
      %p67 = scmp.eq.s32.totalorder %s17, 1
      %p68 = por %p66, %p67
      %p69 = scmp.ne.s32.totalorder %s60, %s61
      %p70 = scmp.eq.s32.totalorder %s17, 0
      %p71 = por %p69, %p70
      %p72 = scmp.ne.s32.totalorder %s60, %s61
      %p73 = scmp.eq.s32.totalorder %s18, 1
      %p74 = por %p72, %p73
      %p76 = scmp.ne.s32.totalorder %s61, %s75
      %p77 = scmp.eq.s32.totalorder %s18, 0
      %p78 = por %p76, %p77
      %s80 = sadd.s32 %s79, 1
      %p83 = scmp.eq.s32.totalorder %s12, 1
      %p84 = scmp.ne.s32.totalorder %s79, %s81
      %p85 = scmp.eq.s32.totalorder %s12, 0
      %p86 = por %p84, %p85
      %p87 = scmp.ne.s32.totalorder %s79, %s81
      %p88 = scmp.eq.s32.totalorder %s17, 1
      %p89 = por %p87, %p88
      %p90 = scmp.ne.s32.totalorder %s81, %s82
      %p91 = scmp.eq.s32.totalorder %s17, 0
      %p92 = por %p90, %p91
      %p93 = scmp.ne.s32.totalorder %s81, %s82
      %p94 = scmp.eq.s32.totalorder %s18, 1
      %p95 = por %p93, %p94
      %p97 = scmp.ne.s32.totalorder %s82, %s96
      %p98 = scmp.eq.s32.totalorder %s18, 0
      %p99 = por %p97, %p98
      %s100 = ssub.s32 %s19, %s31
      %s101 = ssub.s32 %s20, %s27
      %s102 = sor.u32 %s100, %s101
      %p103 = scmp.eq.s32.totalorder %s102, 0
      %s105 = sadd.s32 %s104, 1
      %s106 = scalar_select %p103, %s104, %s105
      %p109 = pneg %p103
      %p110 = scmp.eq.s32.totalorder %s12, 1
      %p111 = por %p109, %p110
      %p112 = scmp.ne.s32.totalorder %s104, %s107
      %p113 = scmp.eq.s32.totalorder %s12, 0
      %p114 = por %p112, %p113
      %p115 = scmp.ne.s32.totalorder %s104, %s107
      %p116 = scmp.eq.s32.totalorder %s17, 1
      %p117 = por %p115, %p116
      %p118 = scmp.ne.s32.totalorder %s107, %s108
      %p119 = scmp.eq.s32.totalorder %s17, 0
      %p120 = por %p118, %p119
      %p121 = scmp.ne.s32.totalorder %s107, %s108
      %p122 = scmp.eq.s32.totalorder %s18, 1
      %p123 = por %p121, %p122
      %p125 = scmp.ne.s32.totalorder %s108, %s124
      %p126 = scmp.eq.s32.totalorder %s18, 0
      %p127 = por %p125, %p126
      %p128 = scmp.le.s32.totalorder 1, %s12
      %p129 = scmp.lt.s32.totalorder %s12, 3
      %p130 = pnand %p128, %p129
      %p131 = pneg %p130
      // Predicated region
      $region9: #{tpu_custom_call.1} parent=5 // pred_check
        _
      $region10: #{tpu_custom_call.1} parent=5 // pred_check_branch
        %133 = sbr.rel (%p130) target = $region12
      $region11: #{tpu_custom_call.1} parent=5 // pred_region
        %s134 = ssub.s32 %s12, 1
        // Predicated region
        $region13: #{tpu_custom_call.1} parent=11 // pred_check
          %p135 = pneg %p71
        $region14: #{tpu_custom_call.1} parent=11 // pred_check_branch
          %137 = sbr.rel (%p135) target = $region16
        $region15: #{tpu_custom_call.1} parent=11 // pred_region
          _
        $region16: #{tpu_custom_call.1} parent=11 // pred_fallthru
          _
        // Predicated region
        $region17: #{tpu_custom_call.1} parent=11 // pred_check
          %p138 = pneg %p92
        $region18: #{tpu_custom_call.1} parent=11 // pred_check_branch
          %140 = sbr.rel (%p138) target = $region20
        $region19: #{tpu_custom_call.1} parent=11 // pred_region
          _
        $region20: #{tpu_custom_call.1} parent=11 // pred_fallthru
          _
      $region12: #{tpu_custom_call.1} parent=5 // pred_fallthru
        _
      %p141 = scmp.lt.s32.totalorder %s12, 2
      // Predicated region
      $region21: #{tpu_custom_call.1} parent=5 // pred_check
        %p142 = pneg %p141
      $region22: #{tpu_custom_call.1} parent=5 // pred_check_branch
        %144 = sbr.rel (%p142) target = $region24
      $region23: #{tpu_custom_call.1} parent=5 // pred_region
        // Predicated region
        $region25: #{tpu_custom_call.1} parent=23 // pred_check
          %p145 = pneg %p44
        $region26: #{tpu_custom_call.1} parent=23 // pred_check_branch
          %147 = sbr.rel (%p145) target = $region28
        $region27: #{tpu_custom_call.1} parent=23 // pred_region
          %p148 = scmp.lt.s32.totalorder %s19, 1
          %s149 = scalar_select %p148, %s19, 1
          %s150 = smul.addr %s149, 3
          %s151 = smul.addr %s150, 4
          %s152 = scalar_lea.vmem %s0, %s151
        $region28: #{tpu_custom_call.1} parent=23 // pred_fallthru
          _
      $region24: #{tpu_custom_call.1} parent=5 // pred_fallthru
        _
      %p153 = scmp.le.s32.totalorder 1, %s12
      %p154 = scmp.lt.s32.totalorder %s12, 3
      %p155 = pnand %p153, %p154
      %p156 = pneg %p155
      // Predicated region
      $region29: #{tpu_custom_call.1} parent=5 // pred_check
        _
      $region30: #{tpu_custom_call.1} parent=5 // pred_check_branch
        %158 = sbr.rel (%p155) target = $region32
      $region31: #{tpu_custom_call.1} parent=5 // pred_region
        %s159 = ssub.s32 %s12, 1
        %p160 = scmp.lt.s32.totalorder %s21, 1
        %s161 = scalar_select %p160, %s21, 1
        %s162 = smul.addr %s161, 3
        %s163 = smul.addr %s162, 4
        %s164 = scalar_lea.vmem %s0, %s163
        %p165 = pneg %p50
        %p166 = pneg %p47
        %p167 = pneg %p71
        %p168 = pneg %p68
        %p169 = pneg %p92
        %p170 = pneg %p89
        %p171 = pneg %p120
        %p172 = pneg %p117
        %s173 = sand.u32 %s107, 1
        %s174 = scalar_lea.sflag [#allocation3], %s173
        %s175 = sand.u32 %s107, 1
        %s176 = smul.addr %s175, 24
        %s177 = scalar_lea.vmem [#allocation2], %s176
        %p178 = scmp.lt.s32.totalorder %s21, 1
        %s179 = scalar_select %p178, %s21, 1
        %s180 = smul.addr %s179, 3
        %s181 = smul.addr %s180, 4
        %s182 = scalar_lea.vmem %s0, %s181
        %s183 = smul.u32 3, %s22
        %v184 = vld [vmem:[%s182] sm:$0xff]
        %v185 = vld [vmem:[%s182 + $0x8] sm:$0xf]
        %v186 = vld [vmem:[%s1] sm:$0xff]
        %s187 = scalar_lea.vmem %s1, 8
        %v188 = vld [vmem:[%s187] sm:$0xff]
        %v191 = vcombine.high %v184, %v184
        %192 = vrot.lane.b32.xlu0 %v184, 127
        %v193 = vpop.permute.xlu0 %192
        %194 = vrot.lane.b32.xlu0 %v191, 127
        %v195 = vpop.permute.xlu0 %194
        %196 = vrot.lane.b32.xlu0 %v185, 127
        %v197 = vpop.permute.xlu0 %196
        %vm198 = vcmask 1039360
        %v199 = vsel %vm198, %v193, %v195
        %v200 = vsel %vm198, %v195, %v197
        %vm201 = vcmask 31744
        %v203 = vsel %vm201, %v188, 0
        %vm205 = vcmask 1043456
        %v206 = vsel %vm205, %v199, 0
        %v208 = vsel %vm205, %v200, 0
        %v210 = vsel %vm205, %v197, 0
        %212 = vmatprep.subr.mxu0 %v208
        %213 = vmatpush1.msra.mxu0 %v206
        %214 = vmatprep.subr.mxu0 0.0
        %215 = vmatpush1.msra.mxu0 0.0
        %216 = vmatprep.subr.mxu0 0.0
        %217 = vmatpush1.msra.mxu0 0.0
        %218 = vmatprep.subr.mxu0 0.0
        %219 = vmatpush1.msra.mxu0 0.0
        %220 = vmatprep.subr.mxu0 0.0
        %221 = vmatpush1.msra.mxu0 0.0
        %222 = vmatprep.subr.mxu0 0.0
        %223 = vmatpush1.msra.mxu0 0.0
        %224 = vmatprep.subr.mxu0 0.0
        %225 = vmatpush1.msra.mxu0 0.0
        %226 = vmatprep.subr.mxu0 0.0
        %227 = vmatpush1.msra.mxu0 0.0
        %228 = vmatprep.subr.mxu0 0.0
        %229 = vmatpush1.msra.mxu0 0.0
        %230 = vmatprep.subr.mxu0 0.0
        %231 = vmatpush1.msra.mxu0 0.0
        %232 = vmatprep.subr.mxu0 0.0
        %233 = vmatpush1.msra.mxu0 0.0
        %234 = vmatprep.subr.mxu0 0.0
        %235 = vmatpush1.msra.mxu0 0.0
        %236 = vmatprep.subr.mxu0 0.0
        %237 = vmatpush1.msra.mxu0 0.0
        %238 = vmatprep.subr.mxu0 0.0
        %239 = vmatpush1.msra.mxu0 0.0
        %240 = vmatprep.subr.mxu0 0.0
        %241 = vmatpush1.msra.mxu0 0.0
        %242 = vmatprep.subr.mxu0 0.0
        %243 = vmatpush1.msra.mxu0 0.0
        %244 = vmatprep.subr.mxu0 0.0
        %245 = vmatpush1.msra.mxu0 0.0
        %246 = vmatprep.subr.mxu0 0.0
        %247 = vmatpush1.msra.mxu0 0.0
        %248 = vmatprep.subr.mxu0 0.0
        %249 = vmatpush1.msra.mxu0 0.0
        %250 = vmatprep.subr.mxu0 0.0
        %251 = vmatpush1.msra.mxu0 0.0
        %252 = vmatprep.subr.mxu0 0.0
        %253 = vmatpush1.msra.mxu0 0.0
        %254 = vmatprep.subr.mxu0 0.0
        %255 = vmatpush1.msra.mxu0 0.0
        %256 = vmatprep.subr.mxu0 0.0
        %257 = vmatpush1.msra.mxu0 0.0
        %258 = vmatprep.subr.mxu0 0.0
        %259 = vmatpush1.msra.mxu0 0.0
        %260 = vmatprep.subr.mxu0 0.0
        %261 = vmatpush1.msra.mxu0 0.0
        %262 = vmatprep.subr.mxu0 0.0
        %263 = vmatpush1.msra.mxu0 0.0
        %264 = vmatprep.subr.mxu0 0.0
        %265 = vmatpush1.msra.mxu0 0.0
        %266 = vmatprep.subr.mxu0 0.0
        %267 = vmatpush1.msra.mxu0 0.0
        %268 = vmatprep.subr.mxu0 0.0
        %269 = vmatpush1.msra.mxu0 0.0
        %270 = vmatprep.subr.mxu0 0.0
        %271 = vmatpush1.msra.mxu0 0.0
        %272 = vmatprep.subr.mxu0 0.0
        %273 = vmatpush1.msra.mxu0 0.0
        %274 = vmatprep.subr.mxu0 0.0
        %275 = vmatpush1.msra.mxu0 0.0
        %276 = vmatprep.mubr.f32.mxu0 0.0
        %277 = vmatmul.mubr.f32.gmra.mrb[0].mxu0 %v203
        %v278 = vpop.f32.mrb[0].mxu0
        %v279 = vadd.f32 0.0, %v278
        %v280 = vpop.f32.mrb[0].mxu0
        %v281 = vadd.f32 0.0, %v280
        %282 = vdwg.mxu0
        %283 = vmatprep.subr.mxu0 0.0
        %284 = vmatpush1.msra.mxu0 %v210
        %285 = vmatprep.subr.mxu0 0.0
        %286 = vmatpush1.msra.mxu0 0.0
        %287 = vmatprep.subr.mxu0 0.0
        %288 = vmatpush1.msra.mxu0 0.0
        %289 = vmatprep.subr.mxu0 0.0
        %290 = vmatpush1.msra.mxu0 0.0
        %291 = vmatprep.subr.mxu0 0.0
        %292 = vmatpush1.msra.mxu0 0.0
        %293 = vmatprep.subr.mxu0 0.0
        %294 = vmatpush1.msra.mxu0 0.0
        %295 = vmatprep.subr.mxu0 0.0
        %296 = vmatpush1.msra.mxu0 0.0
        %297 = vmatprep.subr.mxu0 0.0
        %298 = vmatpush1.msra.mxu0 0.0
        %299 = vmatprep.subr.mxu0 0.0
        %300 = vmatpush1.msra.mxu0 0.0
        %301 = vmatprep.subr.mxu0 0.0
        %302 = vmatpush1.msra.mxu0 0.0
        %303 = vmatprep.subr.mxu0 0.0
        %304 = vmatpush1.msra.mxu0 0.0
        %305 = vmatprep.subr.mxu0 0.0
        %306 = vmatpush1.msra.mxu0 0.0
        %307 = vmatprep.subr.mxu0 0.0
        %308 = vmatpush1.msra.mxu0 0.0
        %309 = vmatprep.subr.mxu0 0.0
        %310 = vmatpush1.msra.mxu0 0.0
        %311 = vmatprep.subr.mxu0 0.0
        %312 = vmatpush1.msra.mxu0 0.0
        %313 = vmatprep.subr.mxu0 0.0
        %314 = vmatpush1.msra.mxu0 0.0
        %315 = vmatprep.subr.mxu0 0.0
        %316 = vmatpush1.msra.mxu0 0.0
        %317 = vmatprep.subr.mxu0 0.0
        %318 = vmatpush1.msra.mxu0 0.0
        %319 = vmatprep.subr.mxu0 0.0
        %320 = vmatpush1.msra.mxu0 0.0
        %321 = vmatprep.subr.mxu0 0.0
        %322 = vmatpush1.msra.mxu0 0.0
        %323 = vmatprep.subr.mxu0 0.0
        %324 = vmatpush1.msra.mxu0 0.0
        %325 = vmatprep.subr.mxu0 0.0
        %326 = vmatpush1.msra.mxu0 0.0
        %327 = vmatprep.subr.mxu0 0.0
        %328 = vmatpush1.msra.mxu0 0.0
        %329 = vmatprep.subr.mxu0 0.0
        %330 = vmatpush1.msra.mxu0 0.0
        %331 = vmatprep.subr.mxu0 0.0
        %332 = vmatpush1.msra.mxu0 0.0
        %333 = vmatprep.subr.mxu0 0.0
        %334 = vmatpush1.msra.mxu0 0.0
        %335 = vmatprep.subr.mxu0 0.0
        %336 = vmatpush1.msra.mxu0 0.0
        %337 = vmatprep.subr.mxu0 0.0
        %338 = vmatpush1.msra.mxu0 0.0
        %339 = vmatprep.subr.mxu0 0.0
        %340 = vmatpush1.msra.mxu0 0.0
        %341 = vmatprep.subr.mxu0 0.0
        %342 = vmatpush1.msra.mxu0 0.0
        %343 = vmatprep.subr.mxu0 0.0
        %344 = vmatpush1.msra.mxu0 0.0
        %345 = vmatprep.subr.mxu0 0.0
        %346 = vmatpush1.msra.mxu0 0.0
        %347 = vmatprep.mubr.f32.mxu0 0.0
        %348 = vmatmul.mubr.f32.gmra.mrb[0].mxu0 %v203
        %v349 = vpop.f32.mrb[0].mxu0
        %v350 = vadd.f32 0.0, %v349
        %v351 = vpop.f32.mrb[0].mxu0
        %352 = vdwg.mxu0
        %v354 = vsel %vm201, %v186, 0
        %v356 = vsel %vm205, %v184, 0
        %v358 = vsel %vm205, %v191, 0
        %v360 = vsel %vm205, %v185, 0
        %362 = vmatprep.subr.mxu0 %v358
        %363 = vmatpush1.msra.mxu0 %v356
        %364 = vmatprep.subr.mxu0 0.0
        %365 = vmatpush1.msra.mxu0 0.0
        %366 = vmatprep.subr.mxu0 0.0
        %367 = vmatpush1.msra.mxu0 0.0
        %368 = vmatprep.subr.mxu0 0.0
        %369 = vmatpush1.msra.mxu0 0.0
        %370 = vmatprep.subr.mxu0 0.0
        %371 = vmatpush1.msra.mxu0 0.0
        %372 = vmatprep.subr.mxu0 0.0
        %373 = vmatpush1.msra.mxu0 0.0
        %374 = vmatprep.subr.mxu0 0.0
        %375 = vmatpush1.msra.mxu0 0.0
        %376 = vmatprep.subr.mxu0 0.0
        %377 = vmatpush1.msra.mxu0 0.0
        %378 = vmatprep.subr.mxu0 0.0
        %379 = vmatpush1.msra.mxu0 0.0
        %380 = vmatprep.subr.mxu0 0.0
        %381 = vmatpush1.msra.mxu0 0.0
        %382 = vmatprep.subr.mxu0 0.0
        %383 = vmatpush1.msra.mxu0 0.0
        %384 = vmatprep.subr.mxu0 0.0
        %385 = vmatpush1.msra.mxu0 0.0
        %386 = vmatprep.subr.mxu0 0.0
        %387 = vmatpush1.msra.mxu0 0.0
        %388 = vmatprep.subr.mxu0 0.0
        %389 = vmatpush1.msra.mxu0 0.0
        %390 = vmatprep.subr.mxu0 0.0
        %391 = vmatpush1.msra.mxu0 0.0
        %392 = vmatprep.subr.mxu0 0.0
        %393 = vmatpush1.msra.mxu0 0.0
        %394 = vmatprep.subr.mxu0 0.0
        %395 = vmatpush1.msra.mxu0 0.0
        %396 = vmatprep.subr.mxu0 0.0
        %397 = vmatpush1.msra.mxu0 0.0
        %398 = vmatprep.subr.mxu0 0.0
        %399 = vmatpush1.msra.mxu0 0.0
        %400 = vmatprep.subr.mxu0 0.0
        %401 = vmatpush1.msra.mxu0 0.0
        %402 = vmatprep.subr.mxu0 0.0
        %403 = vmatpush1.msra.mxu0 0.0
        %404 = vmatprep.subr.mxu0 0.0
        %405 = vmatpush1.msra.mxu0 0.0
        %406 = vmatprep.subr.mxu0 0.0
        %407 = vmatpush1.msra.mxu0 0.0
        %408 = vmatprep.subr.mxu0 0.0
        %409 = vmatpush1.msra.mxu0 0.0
        %410 = vmatprep.subr.mxu0 0.0
        %411 = vmatpush1.msra.mxu0 0.0
        %412 = vmatprep.subr.mxu0 0.0
        %413 = vmatpush1.msra.mxu0 0.0
        %414 = vmatprep.subr.mxu0 0.0
        %415 = vmatpush1.msra.mxu0 0.0
        %416 = vmatprep.subr.mxu0 0.0
        %417 = vmatpush1.msra.mxu0 0.0
        %418 = vmatprep.subr.mxu0 0.0
        %419 = vmatpush1.msra.mxu0 0.0
        %420 = vmatprep.subr.mxu0 0.0
        %421 = vmatpush1.msra.mxu0 0.0
        %422 = vmatprep.subr.mxu0 0.0
        %423 = vmatpush1.msra.mxu0 0.0
        %424 = vmatprep.subr.mxu0 0.0
        %425 = vmatpush1.msra.mxu0 0.0
        %426 = vmatprep.mubr.f32.mxu0 0.0
        %427 = vmatmul.mubr.f32.gmra.mrb[0].mxu0 %v354
        %v428 = vpop.f32.mrb[0].mxu0
        %v429 = vadd.f32 %v279, %v428
        %v430 = vpop.f32.mrb[0].mxu0
        %v431 = vadd.f32 %v281, %v430
        %432 = vdwg.mxu0
        %433 = vmatprep.subr.mxu0 0.0
        %434 = vmatpush1.msra.mxu0 %v360
        %435 = vmatprep.subr.mxu0 0.0
        %436 = vmatpush1.msra.mxu0 0.0
        %437 = vmatprep.subr.mxu0 0.0
        %438 = vmatpush1.msra.mxu0 0.0
        %439 = vmatprep.subr.mxu0 0.0
        %440 = vmatpush1.msra.mxu0 0.0
        %441 = vmatprep.subr.mxu0 0.0
        %442 = vmatpush1.msra.mxu0 0.0
        %443 = vmatprep.subr.mxu0 0.0
        %444 = vmatpush1.msra.mxu0 0.0
        %445 = vmatprep.subr.mxu0 0.0
        %446 = vmatpush1.msra.mxu0 0.0
        %447 = vmatprep.subr.mxu0 0.0
        %448 = vmatpush1.msra.mxu0 0.0
        %449 = vmatprep.subr.mxu0 0.0
        %450 = vmatpush1.msra.mxu0 0.0
        %451 = vmatprep.subr.mxu0 0.0
        %452 = vmatpush1.msra.mxu0 0.0
        %453 = vmatprep.subr.mxu0 0.0
        %454 = vmatpush1.msra.mxu0 0.0
        %455 = vmatprep.subr.mxu0 0.0
        %456 = vmatpush1.msra.mxu0 0.0
        %457 = vmatprep.subr.mxu0 0.0
        %458 = vmatpush1.msra.mxu0 0.0
        %459 = vmatprep.subr.mxu0 0.0
        %460 = vmatpush1.msra.mxu0 0.0
        %461 = vmatprep.subr.mxu0 0.0
        %462 = vmatpush1.msra.mxu0 0.0
        %463 = vmatprep.subr.mxu0 0.0
        %464 = vmatpush1.msra.mxu0 0.0
        %465 = vmatprep.subr.mxu0 0.0
        %466 = vmatpush1.msra.mxu0 0.0
        %467 = vmatprep.subr.mxu0 0.0
        %468 = vmatpush1.msra.mxu0 0.0
        %469 = vmatprep.subr.mxu0 0.0
        %470 = vmatpush1.msra.mxu0 0.0
        %471 = vmatprep.subr.mxu0 0.0
        %472 = vmatpush1.msra.mxu0 0.0
        %473 = vmatprep.subr.mxu0 0.0
        %474 = vmatpush1.msra.mxu0 0.0
        %475 = vmatprep.subr.mxu0 0.0
        %476 = vmatpush1.msra.mxu0 0.0
        %477 = vmatprep.subr.mxu0 0.0
        %478 = vmatpush1.msra.mxu0 0.0
        %479 = vmatprep.subr.mxu0 0.0
        %480 = vmatpush1.msra.mxu0 0.0
        %481 = vmatprep.subr.mxu0 0.0
        %482 = vmatpush1.msra.mxu0 0.0
        %483 = vmatprep.subr.mxu0 0.0
        %484 = vmatpush1.msra.mxu0 0.0
        %485 = vmatprep.subr.mxu0 0.0
        %486 = vmatpush1.msra.mxu0 0.0
        %487 = vmatprep.subr.mxu0 0.0
        %488 = vmatpush1.msra.mxu0 0.0
        %489 = vmatprep.subr.mxu0 0.0
        %490 = vmatpush1.msra.mxu0 0.0
        %491 = vmatprep.subr.mxu0 0.0
        %492 = vmatpush1.msra.mxu0 0.0
        %493 = vmatprep.subr.mxu0 0.0
        %494 = vmatpush1.msra.mxu0 0.0
        %495 = vmatprep.subr.mxu0 0.0
        %496 = vmatpush1.msra.mxu0 0.0
        %497 = vmatprep.mubr.f32.mxu0 0.0
        %498 = vmatmul.mubr.f32.gmra.mrb[0].mxu0 %v354
        %v499 = vpop.f32.mrb[0].mxu0
        %v500 = vadd.f32 %v350, %v499
        %v501 = vpop.f32.mrb[0].mxu0
        %502 = vdwg.mxu0
        %s503 = scalar_lea.vmem %s1, 16
        %v504 = vld [vmem:[%s503] sm:$0xff]
        %505 = vrot.lane.b32.xlu0 %v184, 126
        %v506 = vpop.permute.xlu0 %505
        %507 = vrot.lane.b32.xlu0 %v191, 126
        %v508 = vpop.permute.xlu0 %507
        %509 = vrot.lane.b32.xlu0 %v185, 126
        %v510 = vpop.permute.xlu0 %509
        %vm511 = vcmask 1031168
        %v512 = vsel %vm511, %v506, %v508
        %v513 = vsel %vm511, %v508, %v510
        %v515 = vsel %vm201, %v504, 0
        %v517 = vsel %vm205, %v512, 0
        %v519 = vsel %vm205, %v513, 0
        %v521 = vsel %vm205, %v510, 0
        %523 = vmatprep.subr.mxu0 %v519
        %524 = vmatpush1.msra.mxu0 %v517
        %525 = vmatprep.subr.mxu0 0.0
        %526 = vmatpush1.msra.mxu0 0.0
        %527 = vmatprep.subr.mxu0 0.0
        %528 = vmatpush1.msra.mxu0 0.0
        %529 = vmatprep.subr.mxu0 0.0
        %530 = vmatpush1.msra.mxu0 0.0
        %531 = vmatprep.subr.mxu0 0.0
        %532 = vmatpush1.msra.mxu0 0.0
        %533 = vmatprep.subr.mxu0 0.0
        %534 = vmatpush1.msra.mxu0 0.0
        %535 = vmatprep.subr.mxu0 0.0
        %536 = vmatpush1.msra.mxu0 0.0
        %537 = vmatprep.subr.mxu0 0.0
        %538 = vmatpush1.msra.mxu0 0.0
        %539 = vmatprep.subr.mxu0 0.0
        %540 = vmatpush1.msra.mxu0 0.0
        %541 = vmatprep.subr.mxu0 0.0
        %542 = vmatpush1.msra.mxu0 0.0
        %543 = vmatprep.subr.mxu0 0.0
        %544 = vmatpush1.msra.mxu0 0.0
        %545 = vmatprep.subr.mxu0 0.0
        %546 = vmatpush1.msra.mxu0 0.0
        %547 = vmatprep.subr.mxu0 0.0
        %548 = vmatpush1.msra.mxu0 0.0
        %549 = vmatprep.subr.mxu0 0.0
        %550 = vmatpush1.msra.mxu0 0.0
        %551 = vmatprep.subr.mxu0 0.0
        %552 = vmatpush1.msra.mxu0 0.0
        %553 = vmatprep.subr.mxu0 0.0
        %554 = vmatpush1.msra.mxu0 0.0
        %555 = vmatprep.subr.mxu0 0.0
        %556 = vmatpush1.msra.mxu0 0.0
        %557 = vmatprep.subr.mxu0 0.0
        %558 = vmatpush1.msra.mxu0 0.0
        %559 = vmatprep.subr.mxu0 0.0
        %560 = vmatpush1.msra.mxu0 0.0
        %561 = vmatprep.subr.mxu0 0.0
        %562 = vmatpush1.msra.mxu0 0.0
        %563 = vmatprep.subr.mxu0 0.0
        %564 = vmatpush1.msra.mxu0 0.0
        %565 = vmatprep.subr.mxu0 0.0
        %566 = vmatpush1.msra.mxu0 0.0
        %567 = vmatprep.subr.mxu0 0.0
        %568 = vmatpush1.msra.mxu0 0.0
        %569 = vmatprep.subr.mxu0 0.0
        %570 = vmatpush1.msra.mxu0 0.0
        %571 = vmatprep.subr.mxu0 0.0
        %572 = vmatpush1.msra.mxu0 0.0
        %573 = vmatprep.subr.mxu0 0.0
        %574 = vmatpush1.msra.mxu0 0.0
        %575 = vmatprep.subr.mxu0 0.0
        %576 = vmatpush1.msra.mxu0 0.0
        %577 = vmatprep.subr.mxu0 0.0
        %578 = vmatpush1.msra.mxu0 0.0
        %579 = vmatprep.subr.mxu0 0.0
        %580 = vmatpush1.msra.mxu0 0.0
        %581 = vmatprep.subr.mxu0 0.0
        %582 = vmatpush1.msra.mxu0 0.0
        %583 = vmatprep.subr.mxu0 0.0
        %584 = vmatpush1.msra.mxu0 0.0
        %585 = vmatprep.subr.mxu0 0.0
        %586 = vmatpush1.msra.mxu0 0.0
        %587 = vmatprep.mubr.f32.mxu0 0.0
        %588 = vmatmul.mubr.f32.gmra.mrb[0].mxu0 %v515
        %v589 = vpop.f32.mrb[0].mxu0
        %v590 = vadd.f32 0.0, %v589
        %v591 = vpop.f32.mrb[0].mxu0
        %v592 = vadd.f32 0.0, %v591
        %593 = vdwg.mxu0
        %594 = vmatprep.subr.mxu0 0.0
        %595 = vmatpush1.msra.mxu0 %v521
        %596 = vmatprep.subr.mxu0 0.0
        %597 = vmatpush1.msra.mxu0 0.0
        %598 = vmatprep.subr.mxu0 0.0
        %599 = vmatpush1.msra.mxu0 0.0
        %600 = vmatprep.subr.mxu0 0.0
        %601 = vmatpush1.msra.mxu0 0.0
        %602 = vmatprep.subr.mxu0 0.0
        %603 = vmatpush1.msra.mxu0 0.0
        %604 = vmatprep.subr.mxu0 0.0
        %605 = vmatpush1.msra.mxu0 0.0
        %606 = vmatprep.subr.mxu0 0.0
        %607 = vmatpush1.msra.mxu0 0.0
        %608 = vmatprep.subr.mxu0 0.0
        %609 = vmatpush1.msra.mxu0 0.0
        %610 = vmatprep.subr.mxu0 0.0
        %611 = vmatpush1.msra.mxu0 0.0
        %612 = vmatprep.subr.mxu0 0.0
        %613 = vmatpush1.msra.mxu0 0.0
        %614 = vmatprep.subr.mxu0 0.0
        %615 = vmatpush1.msra.mxu0 0.0
        %616 = vmatprep.subr.mxu0 0.0
        %617 = vmatpush1.msra.mxu0 0.0
        %618 = vmatprep.subr.mxu0 0.0
        %619 = vmatpush1.msra.mxu0 0.0
        %620 = vmatprep.subr.mxu0 0.0
        %621 = vmatpush1.msra.mxu0 0.0
        %622 = vmatprep.subr.mxu0 0.0
        %623 = vmatpush1.msra.mxu0 0.0
        %624 = vmatprep.subr.mxu0 0.0
        %625 = vmatpush1.msra.mxu0 0.0
        %626 = vmatprep.subr.mxu0 0.0
        %627 = vmatpush1.msra.mxu0 0.0
        %628 = vmatprep.subr.mxu0 0.0
        %629 = vmatpush1.msra.mxu0 0.0
        %630 = vmatprep.subr.mxu0 0.0
        %631 = vmatpush1.msra.mxu0 0.0
        %632 = vmatprep.subr.mxu0 0.0
        %633 = vmatpush1.msra.mxu0 0.0
        %634 = vmatprep.subr.mxu0 0.0
        %635 = vmatpush1.msra.mxu0 0.0
        %636 = vmatprep.subr.mxu0 0.0
        %637 = vmatpush1.msra.mxu0 0.0
        %638 = vmatprep.subr.mxu0 0.0
        %639 = vmatpush1.msra.mxu0 0.0
        %640 = vmatprep.subr.mxu0 0.0
        %641 = vmatpush1.msra.mxu0 0.0
        %642 = vmatprep.subr.mxu0 0.0
        %643 = vmatpush1.msra.mxu0 0.0
        %644 = vmatprep.subr.mxu0 0.0
        %645 = vmatpush1.msra.mxu0 0.0
        %646 = vmatprep.subr.mxu0 0.0
        %647 = vmatpush1.msra.mxu0 0.0
        %648 = vmatprep.subr.mxu0 0.0
        %649 = vmatpush1.msra.mxu0 0.0
        %650 = vmatprep.subr.mxu0 0.0
        %651 = vmatpush1.msra.mxu0 0.0
        %652 = vmatprep.subr.mxu0 0.0
        %653 = vmatpush1.msra.mxu0 0.0
        %654 = vmatprep.subr.mxu0 0.0
        %655 = vmatpush1.msra.mxu0 0.0
        %656 = vmatprep.subr.mxu0 0.0
        %657 = vmatpush1.msra.mxu0 0.0
        %658 = vmatprep.mubr.f32.mxu0 0.0
        %659 = vmatmul.mubr.f32.gmra.mrb[0].mxu0 %v515
        %v660 = vpop.f32.mrb[0].mxu0
        %v661 = vadd.f32 0.0, %v660
        %v662 = vpop.f32.mrb[0].mxu0
        %663 = vdwg.mxu0
        %v664 = vadd.f32 %v429, %v590
        %v665 = vadd.f32 %v431, %v592
        %v666 = vadd.f32 %v500, %v661
        %s667 = scalar_lea.vmem %s1, 24
        %v668 = vld [vmem:[%s667] sm:$0xff]
        %669 = vrot.lane.b32.xlu0 %v184, 110
        %v670 = vpop.permute.xlu0 %669
        %671 = vrot.lane.b32.xlu0 %v191, 110
        %v672 = vpop.permute.xlu0 %671
        %673 = vrot.lane.b32.xlu0 %v185, 110
        %v674 = vpop.permute.xlu0 %673
        %vm675 = vcmask 900096
        %v676 = vsel %vm675, %v670, %v672
        %v677 = vsel %vm675, %v672, %v674
        %v679 = vsel %vm201, %v668, 0
        %v681 = vsel %vm205, %v676, 0
        %v683 = vsel %vm205, %v677, 0
        %v685 = vsel %vm205, %v674, 0
        %687 = vmatprep.subr.mxu0 %v683
        %688 = vmatpush1.msra.mxu0 %v681
        %689 = vmatprep.subr.mxu0 0.0
        %690 = vmatpush1.msra.mxu0 0.0
        %691 = vmatprep.subr.mxu0 0.0
        %692 = vmatpush1.msra.mxu0 0.0
        %693 = vmatprep.subr.mxu0 0.0
        %694 = vmatpush1.msra.mxu0 0.0
        %695 = vmatprep.subr.mxu0 0.0
        %696 = vmatpush1.msra.mxu0 0.0
        %697 = vmatprep.subr.mxu0 0.0
        %698 = vmatpush1.msra.mxu0 0.0
        %699 = vmatprep.subr.mxu0 0.0
        %700 = vmatpush1.msra.mxu0 0.0
        %701 = vmatprep.subr.mxu0 0.0
        %702 = vmatpush1.msra.mxu0 0.0
        %703 = vmatprep.subr.mxu0 0.0
        %704 = vmatpush1.msra.mxu0 0.0
        %705 = vmatprep.subr.mxu0 0.0
        %706 = vmatpush1.msra.mxu0 0.0
        %707 = vmatprep.subr.mxu0 0.0
        %708 = vmatpush1.msra.mxu0 0.0
        %709 = vmatprep.subr.mxu0 0.0
        %710 = vmatpush1.msra.mxu0 0.0
        %711 = vmatprep.subr.mxu0 0.0
        %712 = vmatpush1.msra.mxu0 0.0
        %713 = vmatprep.subr.mxu0 0.0
        %714 = vmatpush1.msra.mxu0 0.0
        %715 = vmatprep.subr.mxu0 0.0
        %716 = vmatpush1.msra.mxu0 0.0
        %717 = vmatprep.subr.mxu0 0.0
        %718 = vmatpush1.msra.mxu0 0.0
        %719 = vmatprep.subr.mxu0 0.0
        %720 = vmatpush1.msra.mxu0 0.0
        %721 = vmatprep.subr.mxu0 0.0
        %722 = vmatpush1.msra.mxu0 0.0
        %723 = vmatprep.subr.mxu0 0.0
        %724 = vmatpush1.msra.mxu0 0.0
        %725 = vmatprep.subr.mxu0 0.0
        %726 = vmatpush1.msra.mxu0 0.0
        %727 = vmatprep.subr.mxu0 0.0
        %728 = vmatpush1.msra.mxu0 0.0
        %729 = vmatprep.subr.mxu0 0.0
        %730 = vmatpush1.msra.mxu0 0.0
        %731 = vmatprep.subr.mxu0 0.0
        %732 = vmatpush1.msra.mxu0 0.0
        %733 = vmatprep.subr.mxu0 0.0
        %734 = vmatpush1.msra.mxu0 0.0
        %735 = vmatprep.subr.mxu0 0.0
        %736 = vmatpush1.msra.mxu0 0.0
        %737 = vmatprep.subr.mxu0 0.0
        %738 = vmatpush1.msra.mxu0 0.0
        %739 = vmatprep.subr.mxu0 0.0
        %740 = vmatpush1.msra.mxu0 0.0
        %741 = vmatprep.subr.mxu0 0.0
        %742 = vmatpush1.msra.mxu0 0.0
        %743 = vmatprep.subr.mxu0 0.0
        %744 = vmatpush1.msra.mxu0 0.0
        %745 = vmatprep.subr.mxu0 0.0
        %746 = vmatpush1.msra.mxu0 0.0
        %747 = vmatprep.subr.mxu0 0.0
        %748 = vmatpush1.msra.mxu0 0.0
        %749 = vmatprep.subr.mxu0 0.0
        %750 = vmatpush1.msra.mxu0 0.0
        %751 = vmatprep.mubr.f32.mxu0 0.0
        %752 = vmatmul.mubr.f32.gmra.mrb[0].mxu0 %v679
        %v753 = vpop.f32.mrb[0].mxu0
        %v754 = vadd.f32 0.0, %v753
        %v755 = vpop.f32.mrb[0].mxu0
        %v756 = vadd.f32 0.0, %v755
        %757 = vdwg.mxu0
        %758 = vmatprep.subr.mxu0 0.0
        %759 = vmatpush1.msra.mxu0 %v685
        %760 = vmatprep.subr.mxu0 0.0
        %761 = vmatpush1.msra.mxu0 0.0
        %762 = vmatprep.subr.mxu0 0.0
        %763 = vmatpush1.msra.mxu0 0.0
        %764 = vmatprep.subr.mxu0 0.0
        %765 = vmatpush1.msra.mxu0 0.0
        %766 = vmatprep.subr.mxu0 0.0
        %767 = vmatpush1.msra.mxu0 0.0
        %768 = vmatprep.subr.mxu0 0.0
        %769 = vmatpush1.msra.mxu0 0.0
        %770 = vmatprep.subr.mxu0 0.0
        %771 = vmatpush1.msra.mxu0 0.0
        %772 = vmatprep.subr.mxu0 0.0
        %773 = vmatpush1.msra.mxu0 0.0
        %774 = vmatprep.subr.mxu0 0.0
        %775 = vmatpush1.msra.mxu0 0.0
        %776 = vmatprep.subr.mxu0 0.0
        %777 = vmatpush1.msra.mxu0 0.0
        %778 = vmatprep.subr.mxu0 0.0
        %779 = vmatpush1.msra.mxu0 0.0
        %780 = vmatprep.subr.mxu0 0.0
        %781 = vmatpush1.msra.mxu0 0.0
        %782 = vmatprep.subr.mxu0 0.0
        %783 = vmatpush1.msra.mxu0 0.0
        %784 = vmatprep.subr.mxu0 0.0
        %785 = vmatpush1.msra.mxu0 0.0
        %786 = vmatprep.subr.mxu0 0.0
        %787 = vmatpush1.msra.mxu0 0.0
        %788 = vmatprep.subr.mxu0 0.0
        %789 = vmatpush1.msra.mxu0 0.0
        %790 = vmatprep.subr.mxu0 0.0
        %791 = vmatpush1.msra.mxu0 0.0
        %792 = vmatprep.subr.mxu0 0.0
        %793 = vmatpush1.msra.mxu0 0.0
        %794 = vmatprep.subr.mxu0 0.0
        %795 = vmatpush1.msra.mxu0 0.0
        %796 = vmatprep.subr.mxu0 0.0
        %797 = vmatpush1.msra.mxu0 0.0
        %798 = vmatprep.subr.mxu0 0.0
        %799 = vmatpush1.msra.mxu0 0.0
        %800 = vmatprep.subr.mxu0 0.0
        %801 = vmatpush1.msra.mxu0 0.0
        %802 = vmatprep.subr.mxu0 0.0
        %803 = vmatpush1.msra.mxu0 0.0
        %804 = vmatprep.subr.mxu0 0.0
        %805 = vmatpush1.msra.mxu0 0.0
        %806 = vmatprep.subr.mxu0 0.0
        %807 = vmatpush1.msra.mxu0 0.0
        %808 = vmatprep.subr.mxu0 0.0
        %809 = vmatpush1.msra.mxu0 0.0
        %810 = vmatprep.subr.mxu0 0.0
        %811 = vmatpush1.msra.mxu0 0.0
        %812 = vmatprep.subr.mxu0 0.0
        %813 = vmatpush1.msra.mxu0 0.0
        %814 = vmatprep.subr.mxu0 0.0
        %815 = vmatpush1.msra.mxu0 0.0
        %816 = vmatprep.subr.mxu0 0.0
        %817 = vmatpush1.msra.mxu0 0.0
        %818 = vmatprep.subr.mxu0 0.0
        %819 = vmatpush1.msra.mxu0 0.0
        %820 = vmatprep.subr.mxu0 0.0
        %821 = vmatpush1.msra.mxu0 0.0
        %822 = vmatprep.mubr.f32.mxu0 0.0
        %823 = vmatmul.mubr.f32.gmra.mrb[0].mxu0 %v679
        %v824 = vpop.f32.mrb[0].mxu0
        %v825 = vadd.f32 0.0, %v824
        %v826 = vpop.f32.mrb[0].mxu0
        %827 = vdwg.mxu0
        %v828 = vadd.f32 %v664, %v754
        %v829 = vadd.f32 %v665, %v756
        %v830 = vadd.f32 %v666, %v825
        %s831 = scalar_lea.vmem %s1, 32
        %v832 = vld [vmem:[%s831] sm:$0xff]
        %833 = vrot.lane.b32.xlu0 %v184, 109
        %v834 = vpop.permute.xlu0 %833
        %835 = vrot.lane.b32.xlu0 %v191, 109
        %v836 = vpop.permute.xlu0 %835
        %837 = vrot.lane.b32.xlu0 %v185, 109
        %v838 = vpop.permute.xlu0 %837
        %vm839 = vcmask 891904
        %v840 = vsel %vm839, %v834, %v836
        %v841 = vsel %vm839, %v836, %v838
        %v843 = vsel %vm201, %v832, 0
        %v845 = vsel %vm205, %v840, 0
        %v847 = vsel %vm205, %v841, 0
        %v849 = vsel %vm205, %v838, 0
        %851 = vmatprep.subr.mxu0 %v847
        %852 = vmatpush1.msra.mxu0 %v845
        %853 = vmatprep.subr.mxu0 0.0
        %854 = vmatpush1.msra.mxu0 0.0
        %855 = vmatprep.subr.mxu0 0.0
        %856 = vmatpush1.msra.mxu0 0.0
        %857 = vmatprep.subr.mxu0 0.0
        %858 = vmatpush1.msra.mxu0 0.0
        %859 = vmatprep.subr.mxu0 0.0
        %860 = vmatpush1.msra.mxu0 0.0
        %861 = vmatprep.subr.mxu0 0.0
        %862 = vmatpush1.msra.mxu0 0.0
        %863 = vmatprep.subr.mxu0 0.0
        %864 = vmatpush1.msra.mxu0 0.0
        %865 = vmatprep.subr.mxu0 0.0
        %866 = vmatpush1.msra.mxu0 0.0
        %867 = vmatprep.subr.mxu0 0.0
        %868 = vmatpush1.msra.mxu0 0.0
        %869 = vmatprep.subr.mxu0 0.0
        %870 = vmatpush1.msra.mxu0 0.0
        %871 = vmatprep.subr.mxu0 0.0
        %872 = vmatpush1.msra.mxu0 0.0
        %873 = vmatprep.subr.mxu0 0.0
        %874 = vmatpush1.msra.mxu0 0.0
        %875 = vmatprep.subr.mxu0 0.0
        %876 = vmatpush1.msra.mxu0 0.0
        %877 = vmatprep.subr.mxu0 0.0
        %878 = vmatpush1.msra.mxu0 0.0
        %879 = vmatprep.subr.mxu0 0.0
        %880 = vmatpush1.msra.mxu0 0.0
        %881 = vmatprep.subr.mxu0 0.0
        %882 = vmatpush1.msra.mxu0 0.0
        %883 = vmatprep.subr.mxu0 0.0
        %884 = vmatpush1.msra.mxu0 0.0
        %885 = vmatprep.subr.mxu0 0.0
        %886 = vmatpush1.msra.mxu0 0.0
        %887 = vmatprep.subr.mxu0 0.0
        %888 = vmatpush1.msra.mxu0 0.0
        %889 = vmatprep.subr.mxu0 0.0
        %890 = vmatpush1.msra.mxu0 0.0
        %891 = vmatprep.subr.mxu0 0.0
        %892 = vmatpush1.msra.mxu0 0.0
        %893 = vmatprep.subr.mxu0 0.0
        %894 = vmatpush1.msra.mxu0 0.0
        %895 = vmatprep.subr.mxu0 0.0
        %896 = vmatpush1.msra.mxu0 0.0
        %897 = vmatprep.subr.mxu0 0.0
        %898 = vmatpush1.msra.mxu0 0.0
        %899 = vmatprep.subr.mxu0 0.0
        %900 = vmatpush1.msra.mxu0 0.0
        %901 = vmatprep.subr.mxu0 0.0
        %902 = vmatpush1.msra.mxu0 0.0
        %903 = vmatprep.subr.mxu0 0.0
        %904 = vmatpush1.msra.mxu0 0.0
        %905 = vmatprep.subr.mxu0 0.0
        %906 = vmatpush1.msra.mxu0 0.0
        %907 = vmatprep.subr.mxu0 0.0
        %908 = vmatpush1.msra.mxu0 0.0
        %909 = vmatprep.subr.mxu0 0.0
        %910 = vmatpush1.msra.mxu0 0.0
        %911 = vmatprep.subr.mxu0 0.0
        %912 = vmatpush1.msra.mxu0 0.0
        %913 = vmatprep.subr.mxu0 0.0
        %914 = vmatpush1.msra.mxu0 0.0
        %915 = vmatprep.mubr.f32.mxu0 0.0
        %916 = vmatmul.mubr.f32.gmra.mrb[0].mxu0 %v843
        %v917 = vpop.f32.mrb[0].mxu0
        %v918 = vadd.f32 0.0, %v917
        %v919 = vpop.f32.mrb[0].mxu0
        %v920 = vadd.f32 0.0, %v919
        %921 = vdwg.mxu0
        %922 = vmatprep.subr.mxu0 0.0
        %923 = vmatpush1.msra.mxu0 %v849
        %924 = vmatprep.subr.mxu0 0.0
        %925 = vmatpush1.msra.mxu0 0.0
        %926 = vmatprep.subr.mxu0 0.0
        %927 = vmatpush1.msra.mxu0 0.0
        %928 = vmatprep.subr.mxu0 0.0
        %929 = vmatpush1.msra.mxu0 0.0
        %930 = vmatprep.subr.mxu0 0.0
        %931 = vmatpush1.msra.mxu0 0.0
        %932 = vmatprep.subr.mxu0 0.0
        %933 = vmatpush1.msra.mxu0 0.0
        %934 = vmatprep.subr.mxu0 0.0
        %935 = vmatpush1.msra.mxu0 0.0
        %936 = vmatprep.subr.mxu0 0.0
        %937 = vmatpush1.msra.mxu0 0.0
        %938 = vmatprep.subr.mxu0 0.0
        %939 = vmatpush1.msra.mxu0 0.0
        %940 = vmatprep.subr.mxu0 0.0
        %941 = vmatpush1.msra.mxu0 0.0
        %942 = vmatprep.subr.mxu0 0.0
        %943 = vmatpush1.msra.mxu0 0.0
        %944 = vmatprep.subr.mxu0 0.0
        %945 = vmatpush1.msra.mxu0 0.0
        %946 = vmatprep.subr.mxu0 0.0
        %947 = vmatpush1.msra.mxu0 0.0
        %948 = vmatprep.subr.mxu0 0.0
        %949 = vmatpush1.msra.mxu0 0.0
        %950 = vmatprep.subr.mxu0 0.0
        %951 = vmatpush1.msra.mxu0 0.0
        %952 = vmatprep.subr.mxu0 0.0
        %953 = vmatpush1.msra.mxu0 0.0
        %954 = vmatprep.subr.mxu0 0.0
        %955 = vmatpush1.msra.mxu0 0.0
        %956 = vmatprep.subr.mxu0 0.0
        %957 = vmatpush1.msra.mxu0 0.0
        %958 = vmatprep.subr.mxu0 0.0
        %959 = vmatpush1.msra.mxu0 0.0
        %960 = vmatprep.subr.mxu0 0.0
        %961 = vmatpush1.msra.mxu0 0.0
        %962 = vmatprep.subr.mxu0 0.0
        %963 = vmatpush1.msra.mxu0 0.0
        %964 = vmatprep.subr.mxu0 0.0
        %965 = vmatpush1.msra.mxu0 0.0
        %966 = vmatprep.subr.mxu0 0.0
        %967 = vmatpush1.msra.mxu0 0.0
        %968 = vmatprep.subr.mxu0 0.0
        %969 = vmatpush1.msra.mxu0 0.0
        %970 = vmatprep.subr.mxu0 0.0
        %971 = vmatpush1.msra.mxu0 0.0
        %972 = vmatprep.subr.mxu0 0.0
        %973 = vmatpush1.msra.mxu0 0.0
        %974 = vmatprep.subr.mxu0 0.0
        %975 = vmatpush1.msra.mxu0 0.0
        %976 = vmatprep.subr.mxu0 0.0
        %977 = vmatpush1.msra.mxu0 0.0
        %978 = vmatprep.subr.mxu0 0.0
        %979 = vmatpush1.msra.mxu0 0.0
        %980 = vmatprep.subr.mxu0 0.0
        %981 = vmatpush1.msra.mxu0 0.0
        %982 = vmatprep.subr.mxu0 0.0
        %983 = vmatpush1.msra.mxu0 0.0
        %984 = vmatprep.subr.mxu0 0.0
        %985 = vmatpush1.msra.mxu0 0.0
        %986 = vmatprep.mubr.f32.mxu0 0.0
        %987 = vmatmul.mubr.f32.gmra.mrb[0].mxu0 %v843
        %v988 = vpop.f32.mrb[0].mxu0
        %v989 = vadd.f32 0.0, %v988
        %v990 = vpop.f32.mrb[0].mxu0
        %991 = vdwg.mxu0
        %v992 = vadd.f32 %v828, %v918
        %v993 = vadd.f32 %v829, %v920
        %v994 = vadd.f32 %v830, %v989
        %s995 = scalar_lea.vmem %s1, 40
        %v996 = vld [vmem:[%s995] sm:$0xff]
        %997 = vrot.lane.b32.xlu0 %v184, 108
        %v998 = vpop.permute.xlu0 %997
        %999 = vrot.lane.b32.xlu0 %v191, 108
        %v1000 = vpop.permute.xlu0 %999
        %1001 = vrot.lane.b32.xlu0 %v185, 108
        %v1002 = vpop.permute.xlu0 %1001
        %vm1003 = vcmask 883712
        %v1004 = vsel %vm1003, %v998, %v1000
        %v1005 = vsel %vm1003, %v1000, %v1002
        %v1007 = vsel %vm201, %v996, 0
        %v1009 = vsel %vm205, %v1004, 0
        %v1011 = vsel %vm205, %v1005, 0
        %v1013 = vsel %vm205, %v1002, 0
        %1015 = vmatprep.subr.mxu0 %v1011
        %1016 = vmatpush1.msra.mxu0 %v1009
        %1017 = vmatprep.subr.mxu0 0.0
        %1018 = vmatpush1.msra.mxu0 0.0
        %1019 = vmatprep.subr.mxu0 0.0
        %1020 = vmatpush1.msra.mxu0 0.0
        %1021 = vmatprep.subr.mxu0 0.0
        %1022 = vmatpush1.msra.mxu0 0.0
        %1023 = vmatprep.subr.mxu0 0.0
        %1024 = vmatpush1.msra.mxu0 0.0
        %1025 = vmatprep.subr.mxu0 0.0
        %1026 = vmatpush1.msra.mxu0 0.0
        %1027 = vmatprep.subr.mxu0 0.0
        %1028 = vmatpush1.msra.mxu0 0.0
        %1029 = vmatprep.subr.mxu0 0.0
        %1030 = vmatpush1.msra.mxu0 0.0
        %1031 = vmatprep.subr.mxu0 0.0
        %1032 = vmatpush1.msra.mxu0 0.0
        %1033 = vmatprep.subr.mxu0 0.0
        %1034 = vmatpush1.msra.mxu0 0.0
        %1035 = vmatprep.subr.mxu0 0.0
        %1036 = vmatpush1.msra.mxu0 0.0
        %1037 = vmatprep.subr.mxu0 0.0
        %1038 = vmatpush1.msra.mxu0 0.0
        %1039 = vmatprep.subr.mxu0 0.0
        %1040 = vmatpush1.msra.mxu0 0.0
        %1041 = vmatprep.subr.mxu0 0.0
        %1042 = vmatpush1.msra.mxu0 0.0
        %1043 = vmatprep.subr.mxu0 0.0
        %1044 = vmatpush1.msra.mxu0 0.0
        %1045 = vmatprep.subr.mxu0 0.0
        %1046 = vmatpush1.msra.mxu0 0.0
        %1047 = vmatprep.subr.mxu0 0.0
        %1048 = vmatpush1.msra.mxu0 0.0
        %1049 = vmatprep.subr.mxu0 0.0
        %1050 = vmatpush1.msra.mxu0 0.0
        %1051 = vmatprep.subr.mxu0 0.0
        %1052 = vmatpush1.msra.mxu0 0.0
        %1053 = vmatprep.subr.mxu0 0.0
        %1054 = vmatpush1.msra.mxu0 0.0
        %1055 = vmatprep.subr.mxu0 0.0
        %1056 = vmatpush1.msra.mxu0 0.0
        %1057 = vmatprep.subr.mxu0 0.0
        %1058 = vmatpush1.msra.mxu0 0.0
        %1059 = vmatprep.subr.mxu0 0.0
        %1060 = vmatpush1.msra.mxu0 0.0
        %1061 = vmatprep.subr.mxu0 0.0
        %1062 = vmatpush1.msra.mxu0 0.0
        %1063 = vmatprep.subr.mxu0 0.0
        %1064 = vmatpush1.msra.mxu0 0.0
        %1065 = vmatprep.subr.mxu0 0.0
        %1066 = vmatpush1.msra.mxu0 0.0
        %1067 = vmatprep.subr.mxu0 0.0
        %1068 = vmatpush1.msra.mxu0 0.0
        %1069 = vmatprep.subr.mxu0 0.0
        %1070 = vmatpush1.msra.mxu0 0.0
        %1071 = vmatprep.subr.mxu0 0.0
        %1072 = vmatpush1.msra.mxu0 0.0
        %1073 = vmatprep.subr.mxu0 0.0
        %1074 = vmatpush1.msra.mxu0 0.0
        %1075 = vmatprep.subr.mxu0 0.0
        %1076 = vmatpush1.msra.mxu0 0.0
        %1077 = vmatprep.subr.mxu0 0.0
        %1078 = vmatpush1.msra.mxu0 0.0
        %1079 = vmatprep.mubr.f32.mxu0 0.0
        %1080 = vmatmul.mubr.f32.gmra.mrb[0].mxu0 %v1007
        %v1081 = vpop.f32.mrb[0].mxu0
        %v1082 = vadd.f32 0.0, %v1081
        %v1083 = vpop.f32.mrb[0].mxu0
        %v1084 = vadd.f32 0.0, %v1083
        %1085 = vdwg.mxu0
        %1086 = vmatprep.subr.mxu0 0.0
        %1087 = vmatpush1.msra.mxu0 %v1013
        %1088 = vmatprep.subr.mxu0 0.0
        %1089 = vmatpush1.msra.mxu0 0.0
        %1090 = vmatprep.subr.mxu0 0.0
        %1091 = vmatpush1.msra.mxu0 0.0
        %1092 = vmatprep.subr.mxu0 0.0
        %1093 = vmatpush1.msra.mxu0 0.0
        %1094 = vmatprep.subr.mxu0 0.0
        %1095 = vmatpush1.msra.mxu0 0.0
        %1096 = vmatprep.subr.mxu0 0.0
        %1097 = vmatpush1.msra.mxu0 0.0
        %1098 = vmatprep.subr.mxu0 0.0
        %1099 = vmatpush1.msra.mxu0 0.0
        %1100 = vmatprep.subr.mxu0 0.0
        %1101 = vmatpush1.msra.mxu0 0.0
        %1102 = vmatprep.subr.mxu0 0.0
        %1103 = vmatpush1.msra.mxu0 0.0
        %1104 = vmatprep.subr.mxu0 0.0
        %1105 = vmatpush1.msra.mxu0 0.0
        %1106 = vmatprep.subr.mxu0 0.0
        %1107 = vmatpush1.msra.mxu0 0.0
        %1108 = vmatprep.subr.mxu0 0.0
        %1109 = vmatpush1.msra.mxu0 0.0
        %1110 = vmatprep.subr.mxu0 0.0
        %1111 = vmatpush1.msra.mxu0 0.0
        %1112 = vmatprep.subr.mxu0 0.0
        %1113 = vmatpush1.msra.mxu0 0.0
        %1114 = vmatprep.subr.mxu0 0.0
        %1115 = vmatpush1.msra.mxu0 0.0
        %1116 = vmatprep.subr.mxu0 0.0
        %1117 = vmatpush1.msra.mxu0 0.0
        %1118 = vmatprep.subr.mxu0 0.0
        %1119 = vmatpush1.msra.mxu0 0.0
        %1120 = vmatprep.subr.mxu0 0.0
        %1121 = vmatpush1.msra.mxu0 0.0
        %1122 = vmatprep.subr.mxu0 0.0
        %1123 = vmatpush1.msra.mxu0 0.0
        %1124 = vmatprep.subr.mxu0 0.0
        %1125 = vmatpush1.msra.mxu0 0.0
        %1126 = vmatprep.subr.mxu0 0.0
        %1127 = vmatpush1.msra.mxu0 0.0
        %1128 = vmatprep.subr.mxu0 0.0
        %1129 = vmatpush1.msra.mxu0 0.0
        %1130 = vmatprep.subr.mxu0 0.0
        %1131 = vmatpush1.msra.mxu0 0.0
        %1132 = vmatprep.subr.mxu0 0.0
        %1133 = vmatpush1.msra.mxu0 0.0
        %1134 = vmatprep.subr.mxu0 0.0
        %1135 = vmatpush1.msra.mxu0 0.0
        %1136 = vmatprep.subr.mxu0 0.0
        %1137 = vmatpush1.msra.mxu0 0.0
        %1138 = vmatprep.subr.mxu0 0.0
        %1139 = vmatpush1.msra.mxu0 0.0
        %1140 = vmatprep.subr.mxu0 0.0
        %1141 = vmatpush1.msra.mxu0 0.0
        %1142 = vmatprep.subr.mxu0 0.0
        %1143 = vmatpush1.msra.mxu0 0.0
        %1144 = vmatprep.subr.mxu0 0.0
        %1145 = vmatpush1.msra.mxu0 0.0
        %1146 = vmatprep.subr.mxu0 0.0
        %1147 = vmatpush1.msra.mxu0 0.0
        %1148 = vmatprep.subr.mxu0 0.0
        %1149 = vmatpush1.msra.mxu0 0.0
        %1150 = vmatprep.mubr.f32.mxu0 0.0
        %1151 = vmatmul.mubr.f32.gmra.mrb[0].mxu0 %v1007
        %v1152 = vpop.f32.mrb[0].mxu0
        %v1153 = vadd.f32 0.0, %v1152
        %v1154 = vpop.f32.mrb[0].mxu0
        %1155 = vdwg.mxu0
        %v1156 = vadd.f32 %v992, %v1082
        %v1157 = vadd.f32 %v993, %v1084
        %v1158 = vadd.f32 %v994, %v1153
        %s1159 = scalar_lea.vmem %s1, 48
        %v1160 = vld [vmem:[%s1159] sm:$0xff]
        %1161 = vrot.lane.b32.xlu0 %v184, 92
        %v1162 = vpop.permute.xlu0 %1161
        %1163 = vrot.lane.b32.xlu0 %v191, 92
        %v1164 = vpop.permute.xlu0 %1163
        %1165 = vrot.lane.b32.xlu0 %v185, 92
        %v1166 = vpop.permute.xlu0 %1165
        %vm1167 = vcmask 752640
        %v1168 = vsel %vm1167, %v1162, %v1164
        %v1169 = vsel %vm1167, %v1164, %v1166
        %v1171 = vsel %vm201, %v1160, 0
        %v1173 = vsel %vm205, %v1168, 0
        %v1175 = vsel %vm205, %v1169, 0
        %v1177 = vsel %vm205, %v1166, 0
        %1179 = vmatprep.subr.mxu0 %v1175
        %1180 = vmatpush1.msra.mxu0 %v1173
        %1181 = vmatprep.subr.mxu0 0.0
        %1182 = vmatpush1.msra.mxu0 0.0
        %1183 = vmatprep.subr.mxu0 0.0
        %1184 = vmatpush1.msra.mxu0 0.0
        %1185 = vmatprep.subr.mxu0 0.0
        %1186 = vmatpush1.msra.mxu0 0.0
        %1187 = vmatprep.subr.mxu0 0.0
        %1188 = vmatpush1.msra.mxu0 0.0
        %1189 = vmatprep.subr.mxu0 0.0
        %1190 = vmatpush1.msra.mxu0 0.0
        %1191 = vmatprep.subr.mxu0 0.0
        %1192 = vmatpush1.msra.mxu0 0.0
        %1193 = vmatprep.subr.mxu0 0.0
        %1194 = vmatpush1.msra.mxu0 0.0
        %1195 = vmatprep.subr.mxu0 0.0
        %1196 = vmatpush1.msra.mxu0 0.0
        %1197 = vmatprep.subr.mxu0 0.0
        %1198 = vmatpush1.msra.mxu0 0.0
        %1199 = vmatprep.subr.mxu0 0.0
        %1200 = vmatpush1.msra.mxu0 0.0
        %1201 = vmatprep.subr.mxu0 0.0
        %1202 = vmatpush1.msra.mxu0 0.0
        %1203 = vmatprep.subr.mxu0 0.0
        %1204 = vmatpush1.msra.mxu0 0.0
        %1205 = vmatprep.subr.mxu0 0.0
        %1206 = vmatpush1.msra.mxu0 0.0
        %1207 = vmatprep.subr.mxu0 0.0
        %1208 = vmatpush1.msra.mxu0 0.0
        %1209 = vmatprep.subr.mxu0 0.0
        %1210 = vmatpush1.msra.mxu0 0.0
        %1211 = vmatprep.subr.mxu0 0.0
        %1212 = vmatpush1.msra.mxu0 0.0
        %1213 = vmatprep.subr.mxu0 0.0
        %1214 = vmatpush1.msra.mxu0 0.0
        %1215 = vmatprep.subr.mxu0 0.0
        %1216 = vmatpush1.msra.mxu0 0.0
        %1217 = vmatprep.subr.mxu0 0.0
        %1218 = vmatpush1.msra.mxu0 0.0
        %1219 = vmatprep.subr.mxu0 0.0
        %1220 = vmatpush1.msra.mxu0 0.0
        %1221 = vmatprep.subr.mxu0 0.0
        %1222 = vmatpush1.msra.mxu0 0.0
        %1223 = vmatprep.subr.mxu0 0.0
        %1224 = vmatpush1.msra.mxu0 0.0
        %1225 = vmatprep.subr.mxu0 0.0
        %1226 = vmatpush1.msra.mxu0 0.0
        %1227 = vmatprep.subr.mxu0 0.0
        %1228 = vmatpush1.msra.mxu0 0.0
        %1229 = vmatprep.subr.mxu0 0.0
        %1230 = vmatpush1.msra.mxu0 0.0
        %1231 = vmatprep.subr.mxu0 0.0
        %1232 = vmatpush1.msra.mxu0 0.0
        %1233 = vmatprep.subr.mxu0 0.0
        %1234 = vmatpush1.msra.mxu0 0.0
        %1235 = vmatprep.subr.mxu0 0.0
        %1236 = vmatpush1.msra.mxu0 0.0
        %1237 = vmatprep.subr.mxu0 0.0
        %1238 = vmatpush1.msra.mxu0 0.0
        %1239 = vmatprep.subr.mxu0 0.0
        %1240 = vmatpush1.msra.mxu0 0.0
        %1241 = vmatprep.subr.mxu0 0.0
        %1242 = vmatpush1.msra.mxu0 0.0
        %1243 = vmatprep.mubr.f32.mxu0 0.0
        %1244 = vmatmul.mubr.f32.gmra.mrb[0].mxu0 %v1171
        %v1245 = vpop.f32.mrb[0].mxu0
        %v1246 = vadd.f32 0.0, %v1245
        %v1247 = vpop.f32.mrb[0].mxu0
        %v1248 = vadd.f32 0.0, %v1247
        %1249 = vdwg.mxu0
        %1250 = vmatprep.subr.mxu0 0.0
        %1251 = vmatpush1.msra.mxu0 %v1177
        %1252 = vmatprep.subr.mxu0 0.0
        %1253 = vmatpush1.msra.mxu0 0.0
        %1254 = vmatprep.subr.mxu0 0.0
        %1255 = vmatpush1.msra.mxu0 0.0
        %1256 = vmatprep.subr.mxu0 0.0
        %1257 = vmatpush1.msra.mxu0 0.0
        %1258 = vmatprep.subr.mxu0 0.0
        %1259 = vmatpush1.msra.mxu0 0.0
        %1260 = vmatprep.subr.mxu0 0.0
        %1261 = vmatpush1.msra.mxu0 0.0
        %1262 = vmatprep.subr.mxu0 0.0
        %1263 = vmatpush1.msra.mxu0 0.0
        %1264 = vmatprep.subr.mxu0 0.0
        %1265 = vmatpush1.msra.mxu0 0.0
        %1266 = vmatprep.subr.mxu0 0.0
        %1267 = vmatpush1.msra.mxu0 0.0
        %1268 = vmatprep.subr.mxu0 0.0
        %1269 = vmatpush1.msra.mxu0 0.0
        %1270 = vmatprep.subr.mxu0 0.0
        %1271 = vmatpush1.msra.mxu0 0.0
        %1272 = vmatprep.subr.mxu0 0.0
        %1273 = vmatpush1.msra.mxu0 0.0
        %1274 = vmatprep.subr.mxu0 0.0
        %1275 = vmatpush1.msra.mxu0 0.0
        %1276 = vmatprep.subr.mxu0 0.0
        %1277 = vmatpush1.msra.mxu0 0.0
        %1278 = vmatprep.subr.mxu0 0.0
        %1279 = vmatpush1.msra.mxu0 0.0
        %1280 = vmatprep.subr.mxu0 0.0
        %1281 = vmatpush1.msra.mxu0 0.0
        %1282 = vmatprep.subr.mxu0 0.0
        %1283 = vmatpush1.msra.mxu0 0.0
        %1284 = vmatprep.subr.mxu0 0.0
        %1285 = vmatpush1.msra.mxu0 0.0
        %1286 = vmatprep.subr.mxu0 0.0
        %1287 = vmatpush1.msra.mxu0 0.0
        %1288 = vmatprep.subr.mxu0 0.0
        %1289 = vmatpush1.msra.mxu0 0.0
        %1290 = vmatprep.subr.mxu0 0.0
        %1291 = vmatpush1.msra.mxu0 0.0
        %1292 = vmatprep.subr.mxu0 0.0
        %1293 = vmatpush1.msra.mxu0 0.0
        %1294 = vmatprep.subr.mxu0 0.0
        %1295 = vmatpush1.msra.mxu0 0.0
        %1296 = vmatprep.subr.mxu0 0.0
        %1297 = vmatpush1.msra.mxu0 0.0
        %1298 = vmatprep.subr.mxu0 0.0
        %1299 = vmatpush1.msra.mxu0 0.0
        %1300 = vmatprep.subr.mxu0 0.0
        %1301 = vmatpush1.msra.mxu0 0.0
        %1302 = vmatprep.subr.mxu0 0.0
        %1303 = vmatpush1.msra.mxu0 0.0
        %1304 = vmatprep.subr.mxu0 0.0
        %1305 = vmatpush1.msra.mxu0 0.0
        %1306 = vmatprep.subr.mxu0 0.0
        %1307 = vmatpush1.msra.mxu0 0.0
        %1308 = vmatprep.subr.mxu0 0.0
        %1309 = vmatpush1.msra.mxu0 0.0
        %1310 = vmatprep.subr.mxu0 0.0
        %1311 = vmatpush1.msra.mxu0 0.0
        %1312 = vmatprep.subr.mxu0 0.0
        %1313 = vmatpush1.msra.mxu0 0.0
        %1314 = vmatprep.mubr.f32.mxu0 0.0
        %1315 = vmatmul.mubr.f32.gmra.mrb[0].mxu0 %v1171
        %v1316 = vpop.f32.mrb[0].mxu0
        %v1317 = vadd.f32 0.0, %v1316
        %v1318 = vpop.f32.mrb[0].mxu0
        %1319 = vdwg.mxu0
        %v1320 = vadd.f32 %v1156, %v1246
        %v1321 = vadd.f32 %v1157, %v1248
        %v1322 = vadd.f32 %v1158, %v1317
        %s1323 = scalar_lea.vmem %s1, 56
        %v1324 = vld [vmem:[%s1323] sm:$0xff]
        %1325 = vrot.lane.b32.xlu0 %v184, 91
        %v1326 = vpop.permute.xlu0 %1325
        %1327 = vrot.lane.b32.xlu0 %v191, 91
        %v1328 = vpop.permute.xlu0 %1327
        %1329 = vrot.lane.b32.xlu0 %v185, 91
        %v1330 = vpop.permute.xlu0 %1329
        %vm1331 = vcmask 744448
        %v1332 = vsel %vm1331, %v1326, %v1328
        %v1333 = vsel %vm1331, %v1328, %v1330
        %v1335 = vsel %vm201, %v1324, 0
        %v1337 = vsel %vm205, %v1332, 0
        %v1339 = vsel %vm205, %v1333, 0
        %v1341 = vsel %vm205, %v1330, 0
        %1343 = vmatprep.subr.mxu0 %v1339
        %1344 = vmatpush1.msra.mxu0 %v1337
        %1345 = vmatprep.subr.mxu0 0.0
        %1346 = vmatpush1.msra.mxu0 0.0
        %1347 = vmatprep.subr.mxu0 0.0
        %1348 = vmatpush1.msra.mxu0 0.0
        %1349 = vmatprep.subr.mxu0 0.0
        %1350 = vmatpush1.msra.mxu0 0.0
        %1351 = vmatprep.subr.mxu0 0.0
        %1352 = vmatpush1.msra.mxu0 0.0
        %1353 = vmatprep.subr.mxu0 0.0
        %1354 = vmatpush1.msra.mxu0 0.0
        %1355 = vmatprep.subr.mxu0 0.0
        %1356 = vmatpush1.msra.mxu0 0.0
        %1357 = vmatprep.subr.mxu0 0.0
        %1358 = vmatpush1.msra.mxu0 0.0
        %1359 = vmatprep.subr.mxu0 0.0
        %1360 = vmatpush1.msra.mxu0 0.0
        %1361 = vmatprep.subr.mxu0 0.0
        %1362 = vmatpush1.msra.mxu0 0.0
        %1363 = vmatprep.subr.mxu0 0.0
        %1364 = vmatpush1.msra.mxu0 0.0
        %1365 = vmatprep.subr.mxu0 0.0
        %1366 = vmatpush1.msra.mxu0 0.0
        %1367 = vmatprep.subr.mxu0 0.0
        %1368 = vmatpush1.msra.mxu0 0.0
        %1369 = vmatprep.subr.mxu0 0.0
        %1370 = vmatpush1.msra.mxu0 0.0
        %1371 = vmatprep.subr.mxu0 0.0
        %1372 = vmatpush1.msra.mxu0 0.0
        %1373 = vmatprep.subr.mxu0 0.0
        %1374 = vmatpush1.msra.mxu0 0.0
        %1375 = vmatprep.subr.mxu0 0.0
        %1376 = vmatpush1.msra.mxu0 0.0
        %1377 = vmatprep.subr.mxu0 0.0
        %1378 = vmatpush1.msra.mxu0 0.0
        %1379 = vmatprep.subr.mxu0 0.0
        %1380 = vmatpush1.msra.mxu0 0.0
        %1381 = vmatprep.subr.mxu0 0.0
        %1382 = vmatpush1.msra.mxu0 0.0
        %1383 = vmatprep.subr.mxu0 0.0
        %1384 = vmatpush1.msra.mxu0 0.0
        %1385 = vmatprep.subr.mxu0 0.0
        %1386 = vmatpush1.msra.mxu0 0.0
        %1387 = vmatprep.subr.mxu0 0.0
        %1388 = vmatpush1.msra.mxu0 0.0
        %1389 = vmatprep.subr.mxu0 0.0
        %1390 = vmatpush1.msra.mxu0 0.0
        %1391 = vmatprep.subr.mxu0 0.0
        %1392 = vmatpush1.msra.mxu0 0.0
        %1393 = vmatprep.subr.mxu0 0.0
        %1394 = vmatpush1.msra.mxu0 0.0
        %1395 = vmatprep.subr.mxu0 0.0
        %1396 = vmatpush1.msra.mxu0 0.0
        %1397 = vmatprep.subr.mxu0 0.0
        %1398 = vmatpush1.msra.mxu0 0.0
        %1399 = vmatprep.subr.mxu0 0.0
        %1400 = vmatpush1.msra.mxu0 0.0
        %1401 = vmatprep.subr.mxu0 0.0
        %1402 = vmatpush1.msra.mxu0 0.0
        %1403 = vmatprep.subr.mxu0 0.0
        %1404 = vmatpush1.msra.mxu0 0.0
        %1405 = vmatprep.subr.mxu0 0.0
        %1406 = vmatpush1.msra.mxu0 0.0
        %1407 = vmatprep.mubr.f32.mxu0 0.0
        %1408 = vmatmul.mubr.f32.gmra.mrb[0].mxu0 %v1335
        %v1409 = vpop.f32.mrb[0].mxu0
        %v1410 = vadd.f32 0.0, %v1409
        %v1411 = vpop.f32.mrb[0].mxu0
        %v1412 = vadd.f32 0.0, %v1411
        %1413 = vdwg.mxu0
        %1414 = vmatprep.subr.mxu0 0.0
        %1415 = vmatpush1.msra.mxu0 %v1341
        %1416 = vmatprep.subr.mxu0 0.0
        %1417 = vmatpush1.msra.mxu0 0.0
        %1418 = vmatprep.subr.mxu0 0.0
        %1419 = vmatpush1.msra.mxu0 0.0
        %1420 = vmatprep.subr.mxu0 0.0
        %1421 = vmatpush1.msra.mxu0 0.0
        %1422 = vmatprep.subr.mxu0 0.0
        %1423 = vmatpush1.msra.mxu0 0.0
        %1424 = vmatprep.subr.mxu0 0.0
        %1425 = vmatpush1.msra.mxu0 0.0
        %1426 = vmatprep.subr.mxu0 0.0
        %1427 = vmatpush1.msra.mxu0 0.0
        %1428 = vmatprep.subr.mxu0 0.0
        %1429 = vmatpush1.msra.mxu0 0.0
        %1430 = vmatprep.subr.mxu0 0.0
        %1431 = vmatpush1.msra.mxu0 0.0
        %1432 = vmatprep.subr.mxu0 0.0
        %1433 = vmatpush1.msra.mxu0 0.0
        %1434 = vmatprep.subr.mxu0 0.0
        %1435 = vmatpush1.msra.mxu0 0.0
        %1436 = vmatprep.subr.mxu0 0.0
        %1437 = vmatpush1.msra.mxu0 0.0
        %1438 = vmatprep.subr.mxu0 0.0
        %1439 = vmatpush1.msra.mxu0 0.0
        %1440 = vmatprep.subr.mxu0 0.0
        %1441 = vmatpush1.msra.mxu0 0.0
        %1442 = vmatprep.subr.mxu0 0.0
        %1443 = vmatpush1.msra.mxu0 0.0
        %1444 = vmatprep.subr.mxu0 0.0
        %1445 = vmatpush1.msra.mxu0 0.0
        %1446 = vmatprep.subr.mxu0 0.0
        %1447 = vmatpush1.msra.mxu0 0.0
        %1448 = vmatprep.subr.mxu0 0.0
        %1449 = vmatpush1.msra.mxu0 0.0
        %1450 = vmatprep.subr.mxu0 0.0
        %1451 = vmatpush1.msra.mxu0 0.0
        %1452 = vmatprep.subr.mxu0 0.0
        %1453 = vmatpush1.msra.mxu0 0.0
        %1454 = vmatprep.subr.mxu0 0.0
        %1455 = vmatpush1.msra.mxu0 0.0
        %1456 = vmatprep.subr.mxu0 0.0
        %1457 = vmatpush1.msra.mxu0 0.0
        %1458 = vmatprep.subr.mxu0 0.0
        %1459 = vmatpush1.msra.mxu0 0.0
        %1460 = vmatprep.subr.mxu0 0.0
        %1461 = vmatpush1.msra.mxu0 0.0
        %1462 = vmatprep.subr.mxu0 0.0
        %1463 = vmatpush1.msra.mxu0 0.0
        %1464 = vmatprep.subr.mxu0 0.0
        %1465 = vmatpush1.msra.mxu0 0.0
        %1466 = vmatprep.subr.mxu0 0.0
        %1467 = vmatpush1.msra.mxu0 0.0
        %1468 = vmatprep.subr.mxu0 0.0
        %1469 = vmatpush1.msra.mxu0 0.0
        %1470 = vmatprep.subr.mxu0 0.0
        %1471 = vmatpush1.msra.mxu0 0.0
        %1472 = vmatprep.subr.mxu0 0.0
        %1473 = vmatpush1.msra.mxu0 0.0
        %1474 = vmatprep.subr.mxu0 0.0
        %1475 = vmatpush1.msra.mxu0 0.0
        %1476 = vmatprep.subr.mxu0 0.0
        %1477 = vmatpush1.msra.mxu0 0.0
        %1478 = vmatprep.mubr.f32.mxu0 0.0
        %1479 = vmatmul.mubr.f32.gmra.mrb[0].mxu0 %v1335
        %v1480 = vpop.f32.mrb[0].mxu0
        %v1481 = vadd.f32 0.0, %v1480
        %v1482 = vpop.f32.mrb[0].mxu0
        %1483 = vdwg.mxu0
        %v1484 = vadd.f32 %v1320, %v1410
        %v1485 = vadd.f32 %v1321, %v1412
        %v1486 = vadd.f32 %v1322, %v1481
        %s1487 = scalar_lea.vmem %s1, 64
        %v1488 = vld [vmem:[%s1487] sm:$0xff]
        %1489 = vrot.lane.b32.xlu0 %v184, 90
        %v1490 = vpop.permute.xlu0 %1489
        %1491 = vrot.lane.b32.xlu0 %v191, 90
        %v1492 = vpop.permute.xlu0 %1491
        %1493 = vrot.lane.b32.xlu0 %v185, 90
        %v1494 = vpop.permute.xlu0 %1493
        %vm1495 = vcmask 736256
        %v1496 = vsel %vm1495, %v1490, %v1492
        %v1497 = vsel %vm1495, %v1492, %v1494
        %v1499 = vsel %vm201, %v1488, 0
        %v1501 = vsel %vm205, %v1496, 0
        %v1503 = vsel %vm205, %v1497, 0
        %v1505 = vsel %vm205, %v1494, 0
        %1507 = vmatprep.subr.mxu0 %v1503
        %1508 = vmatpush1.msra.mxu0 %v1501
        %1509 = vmatprep.subr.mxu0 0.0
        %1510 = vmatpush1.msra.mxu0 0.0
        %1511 = vmatprep.subr.mxu0 0.0
        %1512 = vmatpush1.msra.mxu0 0.0
        %1513 = vmatprep.subr.mxu0 0.0
        %1514 = vmatpush1.msra.mxu0 0.0
        %1515 = vmatprep.subr.mxu0 0.0
        %1516 = vmatpush1.msra.mxu0 0.0
        %1517 = vmatprep.subr.mxu0 0.0
        %1518 = vmatpush1.msra.mxu0 0.0
        %1519 = vmatprep.subr.mxu0 0.0
        %1520 = vmatpush1.msra.mxu0 0.0
        %1521 = vmatprep.subr.mxu0 0.0
        %1522 = vmatpush1.msra.mxu0 0.0
        %1523 = vmatprep.subr.mxu0 0.0
        %1524 = vmatpush1.msra.mxu0 0.0
        %1525 = vmatprep.subr.mxu0 0.0
        %1526 = vmatpush1.msra.mxu0 0.0
        %1527 = vmatprep.subr.mxu0 0.0
        %1528 = vmatpush1.msra.mxu0 0.0
        %1529 = vmatprep.subr.mxu0 0.0
        %1530 = vmatpush1.msra.mxu0 0.0
        %1531 = vmatprep.subr.mxu0 0.0
        %1532 = vmatpush1.msra.mxu0 0.0
        %1533 = vmatprep.subr.mxu0 0.0
        %1534 = vmatpush1.msra.mxu0 0.0
        %1535 = vmatprep.subr.mxu0 0.0
        %1536 = vmatpush1.msra.mxu0 0.0
        %1537 = vmatprep.subr.mxu0 0.0
        %1538 = vmatpush1.msra.mxu0 0.0
        %1539 = vmatprep.subr.mxu0 0.0
        %1540 = vmatpush1.msra.mxu0 0.0
        %1541 = vmatprep.subr.mxu0 0.0
        %1542 = vmatpush1.msra.mxu0 0.0
        %1543 = vmatprep.subr.mxu0 0.0
        %1544 = vmatpush1.msra.mxu0 0.0
        %1545 = vmatprep.subr.mxu0 0.0
        %1546 = vmatpush1.msra.mxu0 0.0
        %1547 = vmatprep.subr.mxu0 0.0
        %1548 = vmatpush1.msra.mxu0 0.0
        %1549 = vmatprep.subr.mxu0 0.0
        %1550 = vmatpush1.msra.mxu0 0.0
        %1551 = vmatprep.subr.mxu0 0.0
        %1552 = vmatpush1.msra.mxu0 0.0
        %1553 = vmatprep.subr.mxu0 0.0
        %1554 = vmatpush1.msra.mxu0 0.0
        %1555 = vmatprep.subr.mxu0 0.0
        %1556 = vmatpush1.msra.mxu0 0.0
        %1557 = vmatprep.subr.mxu0 0.0
        %1558 = vmatpush1.msra.mxu0 0.0
        %1559 = vmatprep.subr.mxu0 0.0
        %1560 = vmatpush1.msra.mxu0 0.0
        %1561 = vmatprep.subr.mxu0 0.0
        %1562 = vmatpush1.msra.mxu0 0.0
        %1563 = vmatprep.subr.mxu0 0.0
        %1564 = vmatpush1.msra.mxu0 0.0
        %1565 = vmatprep.subr.mxu0 0.0
        %1566 = vmatpush1.msra.mxu0 0.0
        %1567 = vmatprep.subr.mxu0 0.0
        %1568 = vmatpush1.msra.mxu0 0.0
        %1569 = vmatprep.subr.mxu0 0.0
        %1570 = vmatpush1.msra.mxu0 0.0
        %1571 = vmatprep.mubr.f32.mxu0 0.0
        %1572 = vmatmul.mubr.f32.gmra.mrb[0].mxu0 %v1499
        %v1573 = vpop.f32.mrb[0].mxu0
        %v1574 = vadd.f32 0.0, %v1573
        %v1575 = vpop.f32.mrb[0].mxu0
        %v1576 = vadd.f32 0.0, %v1575
        %1577 = vdwg.mxu0
        %1578 = vmatprep.subr.mxu0 0.0
        %1579 = vmatpush1.msra.mxu0 %v1505
        %1580 = vmatprep.subr.mxu0 0.0
        %1581 = vmatpush1.msra.mxu0 0.0
        %1582 = vmatprep.subr.mxu0 0.0
        %1583 = vmatpush1.msra.mxu0 0.0
        %1584 = vmatprep.subr.mxu0 0.0
        %1585 = vmatpush1.msra.mxu0 0.0
        %1586 = vmatprep.subr.mxu0 0.0
        %1587 = vmatpush1.msra.mxu0 0.0
        %1588 = vmatprep.subr.mxu0 0.0
        %1589 = vmatpush1.msra.mxu0 0.0
        %1590 = vmatprep.subr.mxu0 0.0
        %1591 = vmatpush1.msra.mxu0 0.0
        %1592 = vmatprep.subr.mxu0 0.0
        %1593 = vmatpush1.msra.mxu0 0.0
        %1594 = vmatprep.subr.mxu0 0.0
        %1595 = vmatpush1.msra.mxu0 0.0
        %1596 = vmatprep.subr.mxu0 0.0
        %1597 = vmatpush1.msra.mxu0 0.0
        %1598 = vmatprep.subr.mxu0 0.0
        %1599 = vmatpush1.msra.mxu0 0.0
        %1600 = vmatprep.subr.mxu0 0.0
        %1601 = vmatpush1.msra.mxu0 0.0
        %1602 = vmatprep.subr.mxu0 0.0
        %1603 = vmatpush1.msra.mxu0 0.0
        %1604 = vmatprep.subr.mxu0 0.0
        %1605 = vmatpush1.msra.mxu0 0.0
        %1606 = vmatprep.subr.mxu0 0.0
        %1607 = vmatpush1.msra.mxu0 0.0
        %1608 = vmatprep.subr.mxu0 0.0
        %1609 = vmatpush1.msra.mxu0 0.0
        %1610 = vmatprep.subr.mxu0 0.0
        %1611 = vmatpush1.msra.mxu0 0.0
        %1612 = vmatprep.subr.mxu0 0.0
        %1613 = vmatpush1.msra.mxu0 0.0
        %1614 = vmatprep.subr.mxu0 0.0
        %1615 = vmatpush1.msra.mxu0 0.0
        %1616 = vmatprep.subr.mxu0 0.0
        %1617 = vmatpush1.msra.mxu0 0.0
        %1618 = vmatprep.subr.mxu0 0.0
        %1619 = vmatpush1.msra.mxu0 0.0
        %1620 = vmatprep.subr.mxu0 0.0
        %1621 = vmatpush1.msra.mxu0 0.0
        %1622 = vmatprep.subr.mxu0 0.0
        %1623 = vmatpush1.msra.mxu0 0.0
        %1624 = vmatprep.subr.mxu0 0.0
        %1625 = vmatpush1.msra.mxu0 0.0
        %1626 = vmatprep.subr.mxu0 0.0
        %1627 = vmatpush1.msra.mxu0 0.0
        %1628 = vmatprep.subr.mxu0 0.0
        %1629 = vmatpush1.msra.mxu0 0.0
        %1630 = vmatprep.subr.mxu0 0.0
        %1631 = vmatpush1.msra.mxu0 0.0
        %1632 = vmatprep.subr.mxu0 0.0
        %1633 = vmatpush1.msra.mxu0 0.0
        %1634 = vmatprep.subr.mxu0 0.0
        %1635 = vmatpush1.msra.mxu0 0.0
        %1636 = vmatprep.subr.mxu0 0.0
        %1637 = vmatpush1.msra.mxu0 0.0
        %1638 = vmatprep.subr.mxu0 0.0
        %1639 = vmatpush1.msra.mxu0 0.0
        %1640 = vmatprep.subr.mxu0 0.0
        %1641 = vmatpush1.msra.mxu0 0.0
        %1642 = vmatprep.mubr.f32.mxu0 0.0
        %1643 = vmatmul.mubr.f32.gmra.mrb[0].mxu0 %v1499
        %v1644 = vpop.f32.mrb[0].mxu0
        %v1645 = vadd.f32 0.0, %v1644
        %v1646 = vpop.f32.mrb[0].mxu0
        %1647 = vdwg.mxu0
        %v1648 = vadd.f32 %v1484, %v1574
        %v1649 = vadd.f32 %v1485, %v1576
        %v1650 = vadd.f32 %v1486, %v1645
        %v1651 = vld [vmem:[%s2] sm:$0xff]
        %1653 = vset.pattern.permute.xlu0 0
        %1654 = vperm.xlu0 %1653, %v1651
        %v1655 = vpop.permute.xlu0 %1654
        %v1657 = vadd.f32 %v1648, %v1655
        %v1658 = vadd.f32 %v1649, %v1655
        %v1659 = vadd.f32 %v1650, %v1655
        %v1660 = vxor.u32 %v1657, 2147483648
        %v1661 = vxor.u32 %v1658, 2147483648
        %v1662 = vxor.u32 %v1659, 2147483648
        %v1663 = vmul.f32 %v1660, 1.442695
        %v1664 = vpow.pop %v1663
        %v1665 = vmul.f32 %v1661, 1.442695
        %v1666 = vpow.pop %v1665
        %v1667 = vmul.f32 %v1662, 1.442695
        %v1668 = vpow.pop %v1667
        %v1669 = vadd.f32 %v1664, 1.0
        %v1670 = vadd.f32 %v1666, 1.0
        %v1671 = vadd.f32 %v1668, 1.0
        %v1672 = vrcp.pop %v1669
        %v1673 = vmul.f32 1.0, %v1672
        %v1674 = vrcp.pop %v1670
        %v1675 = vmul.f32 1.0, %v1674
        %v1676 = vrcp.pop %v1671
        %v1677 = vmul.f32 1.0, %v1676
        %v1678 = vmul.f32 %v1657, %v1673
        %v1679 = vmul.f32 %v1658, %v1675
        %v1680 = vmul.f32 %v1659, %v1677
        %1681 = vst [vmem:[%s177] sm:$0xff] %v1678
        %1682 = vst [vmem:[%s177 + $0x8] sm:$0xff] %v1679
        %vm1683 = vcmask 261120
        %1684 = vst.msk [vmem:[%s177 + $0x10] sm:$0xff] %vm1683, %v1680
        %s1685 = sand.u32 %s107, 1
        %s1686 = scalar_lea.sflag [#allocation3], %s1685
        %s1687 = sand.u32 %s107, 1
        %s1688 = smul.addr %s1687, 24
        %s1689 = scalar_lea.vmem [#allocation2], %s1688
        // Predicated region
        $region33: #{tpu_custom_call.1} parent=31 // pred_check
          %p1690 = pneg %p117
        $region34: #{tpu_custom_call.1} parent=31 // pred_check_branch
          %1692 = sbr.rel (%p1690) target = $region36
        $region35: #{tpu_custom_call.1} parent=31 // pred_region
          %s1693 = smul.u32 3, %s22
          %s1695 = ssub.s32 384, 384
          %1696 = vsyncadd %s1686, %s1695
          %s1697 = smul.addr %s21, 3
          %s1698 = sadd.s32 %s1693, %s1697
          %s1699 = smul.addr %s1698, 128
          %s1700 = scalar_lea.hbm %s3, %s1699
          %s1702 = sshll.u32 %s1689, 4
          %s1703 = int_to_ptr.vmem [resolvable:$true] %s1702
          %1705 = dma.vmem_to_hbm [thread:$0]  %s1703, 384, %s1700, %s1686
        $region36: #{tpu_custom_call.1} parent=31 // pred_fallthru
          _
      $region32: #{tpu_custom_call.1} parent=5 // pred_fallthru
        _
      %p1706 = scmp.le.s32.totalorder 2, %s12
      // Predicated region
      $region37: #{tpu_custom_call.1} parent=5 // pred_check
        %p1707 = pneg %p1706
      $region38: #{tpu_custom_call.1} parent=5 // pred_check_branch
        %1709 = sbr.rel (%p1707) target = $region40
      $region39: #{tpu_custom_call.1} parent=5 // pred_region
        %s1710 = ssub.s32 %s12, 2
        // Predicated region
        $region41: #{tpu_custom_call.1} parent=39 // pred_check
          %p1711 = pneg %p123
        $region42: #{tpu_custom_call.1} parent=39 // pred_check_branch
          %1713 = sbr.rel (%p1711) target = $region44
        $region43: #{tpu_custom_call.1} parent=39 // pred_region
          %s1714 = sand.u32 %s108, 1
          %s1715 = scalar_lea.sflag [#allocation3], %s1714
          %s1716 = sand.u32 %s108, 1
          %s1717 = smul.addr %s1716, 24
          %s1718 = scalar_lea.vmem [#allocation2], %s1717
          %1719 = dma.done %s1715, 384
        $region44: #{tpu_custom_call.1} parent=39 // pred_fallthru
          _
      $region40: #{tpu_custom_call.1} parent=5 // pred_fallthru
        _
    $region6: #{tpu_custom_call.1} parent=1 // loop_footer
      %s16 = sadd.s32 1, %s12
    $region7: #{tpu_custom_call.1} parent=1 // loop_footer_branch
      %11 = sbr.rel target = $region3
    $region8: #{tpu_custom_call.1} parent=1 // loop_exit
      _
    %1720 = vsyncpa [#allocation3], 1
    %s1721 = scalar_lea.sflag [#allocation3], 1
    %1722 = vsyncpa %s1721, 1

</llo_original>
